<compile_context>
chip_gen: v5e
topology: v5e:2x2
jax: 0.10.0
libtpu: 0.0.40
codegen_flags: <defaults>
</compile_context>

<pallas_src>
import functools
import math

import jax
import jax.numpy as jnp
from jax.experimental import pallas as pl
from jax.experimental.pallas import tpu as pltpu

KS = 7
PAD = KS // 2


def _spatial_attention_kernel(w_ref, x_ref, out_ref, *, H, W):
    # w_ref  : (2*KS*KS,) f32 in SMEM.  First 49 taps = avg channel (pre-scaled
    #          by 1/C so the kernel only needs a channel *sum*); last 49 = max.
    # x_ref  : (NB, C, H*W) input tile in VMEM (lane-dense, zero-row padded so
    #          H*W % 128 == 0).
    # out_ref: (NB, H*W) output tile in VMEM (lane-dense -> unmasked stores).
    NB, C, HW = x_ref.shape

    # Shifted planes stay in bf16 for bf16 inputs (v6e/v7x bf16 VPU/XLU); the
    # tap accumulation below is always f32.
    plane_dtype = jnp.bfloat16 if x_ref.dtype == jnp.bfloat16 else jnp.float32

    # ---- streaming channel reduction: running (sum, max) over C --------------
    # Keeps ~2 planes + 2 accumulators live regardless of C; no cross-sublane
    # XLU reduce, just per-channel VALU adds/maxes.
    xc = x_ref[:, 0, :]
    f_sum = xc.astype(jnp.float32)
    f_max = xc
    for c in range(1, C):
        xc = x_ref[:, c, :]
        f_sum = f_sum + xc.astype(jnp.float32)
        f_max = jnp.maximum(f_max, xc)
    f_sum = f_sum.astype(plane_dtype)       # 1/C is folded into the avg taps
    f_max = f_max.astype(plane_dtype)

    # ---- flattened-coordinate helpers for the one-sided border masks ---------
    # p = h*W + w ;  col(p) = p % W.
    pos = jax.lax.broadcasted_iota(jnp.int32, (NB, HW), 1)
    if (W & (W - 1)) == 0:
        col = jnp.bitwise_and(pos, W - 1)   # p % W (W is a power of two)
    else:
        col = jax.lax.rem(pos, jnp.int32(W))

    # ---- fused stage: column-shift each plane once and FMA it straight into --
    # 7 per-row-offset accumulators g[ki]; the 14 shifted planes are never all
    # live at once (only the current pair + 7 accumulators + f_sum/f_max).
    g = [None] * KS
    for kj in range(KS):
        dj = kj - PAD
        if dj == 0:
            a, m = f_sum, f_max
        else:
            shift = (-dj) % HW                       # a[p] = f[p + dj] within a row
            a = pltpu.roll(f_sum, shift=shift, axis=1)
            m = pltpu.roll(f_max, shift=shift, axis=1)
            # one-sided column mask: the wrap can only enter from one side
            cmask = (col < (W - dj)) if dj > 0 else (col >= (-dj))
            a = jnp.where(cmask, a, 0.0)
            m = jnp.where(cmask, m, 0.0)
        for ki in range(KS):
            wa = w_ref[ki * KS + kj]                 # f32 scalar taps (SMEM)
            wm = w_ref[KS * KS + ki * KS + kj]
            contrib = wa * a + wm * m                # promotes to f32
            g[ki] = contrib if g[ki] is None else g[ki] + contrib

    # ---- row shift + one-sided row mask + final sum ---------------------------
    acc = None
    for ki in range(KS):
        di = ki - PAD
        gk = g[ki]
        if di != 0:
            gk = pltpu.roll(gk, shift=((-di) * W) % HW, axis=1)   # gk[p + di*W]
            rmask = (pos < (H - di) * W) if di > 0 else (pos >= (-di) * W)
            gk = jnp.where(rmask, gk, 0.0)
        acc = gk if acc is None else acc + gk

    # ---- activation: y*sigmoid(y) + y == y*(sigmoid(y)+1); sigmoid -> EUP ----
    y = acc
    out_ref[...] = (y * (jax.nn.sigmoid(y) + 1.0)).astype(out_ref.dtype)


def _pick_batch_block(N, per_item_bytes, budget_bytes):
    """Largest legal batch tile fitting the VMEM budget, preferring grid >= 2."""
    # Legal tiles: multiples of 8 that divide N (sublane constraint on the
    # (NB, HW) output block), or the whole batch.
    divs = [d for d in range(8, N + 1, 8) if N % d == 0]
    fitting = [d for d in divs if d * per_item_bytes <= budget_bytes]
    multi_step = [d for d in fitting if d < N]   # grid >= 2: v7x megacore + pipelining
    if multi_step:
        return max(multi_step)
    if fitting:
        return max(fitting)
    if divs:
        return min(divs)                         # nothing fits budget; smallest legal
    return N                                     # tiny batch (e.g. N=2): grid=(1,)


def spatial_attention(x, conv_w, *, batch_block=None):
    """x: (N, C, H, W) NCHW, conv_w: (1, 2, KS, KS). Returns (N, 1, H, W)."""
    N, C, H, W = x.shape

    # Lane-dense spatial padding: append whole zero rows so (H_pad*W) % 128 == 0.
    # Zero rows reproduce the conv's zero padding exactly; extra output rows are
    # sliced off after the call.  (No-op for the 16x16 demo.)
    row_quantum = 128 // math.gcd(W, 128)
    H_pad = ((H + row_quantum - 1) // row_quantum) * row_quantum
    if H_pad != H:
        x = jnp.pad(x, ((0, 0), (0, 0), (0, H_pad - H), (0, 0)))
    HW = H_pad * W
    x_flat = x.reshape(N, C, HW)

    # VMEM budget per TPU generation (64 MiB on v7x, 128 MiB on v5e/v6e).
    try:
        vmem_cap = int(pltpu.get_tpu_info().vmem_capacity_bytes)
    except Exception:
        vmem_cap = 64 * 1024 * 1024              # assume the smallest (v7x)
    budget = (vmem_cap * 3) // 4                 # ~48 MiB on v7x, ~96 MiB on v5e/v6e

    # Per-batch-element working set: double-buffered input (C sublane-padded to
    # a multiple of 8) + double-buffered output + ~12 live f32 planes in-kernel.
    itemsize = jnp.dtype(x.dtype).itemsize
    C_pad = ((C + 7) // 8) * 8
    per_item = 2 * C_pad * HW * itemsize + 2 * HW * itemsize + 12 * HW * 4

    NB = _pick_batch_block(N, per_item, budget) if batch_block is None else batch_block
    assert N % NB == 0, "batch_block must divide N"
    assert NB == N or NB % 8 == 0, "batch tile must be N or a multiple of 8"

    vmem_limit = int(min(budget, max(per_item * NB, 32 * 1024 * 1024)))

    # Fold the 1/C of the channel mean into the avg-channel conv taps.
    w = conv_w.astype(jnp.float32)
    w_flat = jnp.concatenate(
        [(w[0, 0] * (1.0 / C)).reshape(-1), w[0, 1].reshape(-1)]
    )                                            # (2*KS*KS,)

    kernel = functools.partial(_spatial_attention_kernel, H=H_pad, W=W)

    out_flat = pl.pallas_call(
        kernel,
        out_shape=jax.ShapeDtypeStruct((N, HW), x.dtype),
        grid_spec=pltpu.PrefetchScalarGridSpec(
            num_scalar_prefetch=0,
            grid=(N // NB,),
            in_specs=[
                pl.BlockSpec(memory_space=pltpu.MemorySpace.SMEM),   # conv taps
                pl.BlockSpec((NB, C, HW), lambda n: (n, 0, 0)),      # x tile
            ],
            out_specs=pl.BlockSpec((NB, HW), lambda n: (n, 0)),
        ),
        compiler_params=pltpu.CompilerParams(
            dimension_semantics=("parallel",),
            vmem_limit_bytes=vmem_limit,
        ),
    )(w_flat, x_flat)

    out_flat = out_flat[:, : H * W]              # drop padded rows (no-op here)
    return out_flat.reshape(N, 1, H, W)


def spatial_attention_ref(x, conv_w):
    """Pure-JAX reference mirroring the PyTorch forward."""
    avg = jnp.mean(x, axis=1, keepdims=True)
    mx = jnp.max(x, axis=1, keepdims=True)
    cat = jnp.concatenate([avg, mx], axis=1)     # (N, 2, H, W)
    y = jax.lax.conv_general_dilated(
        cat, conv_w,
        window_strides=(1, 1),
        padding=[(PAD, PAD), (PAD, PAD)],
        dimension_numbers=("NCHW", "OIHW", "NCHW"),
    )
    attn = jax.nn.sigmoid(y)
    return y * attn + y


if __name__ == "__main__":
    key = jax.random.PRNGKey(0)
    kx, kw = jax.random.split(key)

    N, C, H, W = 2, 4, 16, 16
    x = jax.random.normal(kx, (N, C, H, W), dtype=jnp.float32)

    # Deterministic conv weight init (kaiming-uniform-like scale), shape (1, 2, 7, 7).
    fan_in = 2 * KS * KS
    bound = 1.0 / (fan_in ** 0.5)
    conv_w = jax.random.uniform(
        kw, (1, 2, KS, KS), minval=-bound, maxval=bound, dtype=jnp.float32
    )

    out = jax.block_until_ready(spatial_attention(x, conv_w))
    ref = jax.block_until_ready(spatial_attention_ref(x, conv_w))

    assert out.shape == (N, 1, H, W), out.shape
    assert jnp.allclose(out, ref, rtol=1e-4, atol=1e-4), (
        float(jnp.max(jnp.abs(out - ref)))
    )

    print("KERNEL_OK")
</pallas_src>

<mosaic_0001>
module attributes {stable_mosaic.version = 11 : i64} {
  func.func @_spatial_attention_kernel(%arg0: i32, %arg1: memref<98xf32, #tpu.memory_space<smem>>, %arg2: memref<2x4x256xf32, #tpu.memory_space<vmem>>, %arg3: memref<2x256xf32, #tpu.memory_space<vmem>>) attributes {dimension_semantics = [#tpu.dimension_semantics<parallel>], iteration_bounds = array<i64: 1>, scalar_prefetch = 0 : i64, scratch_operands = 0 : i64, tpu.core_type = #tpu.core_type<tc>, window_params = [{transform_indices = @transform_0, window_bounds = array<i64: 98>}, {transform_indices = @transform_1, window_bounds = array<i64: 2, 4, 256>}, {transform_indices = @transform_2, window_bounds = array<i64: 2, 256>}]} {
    %c0 = arith.constant 0 : index
    %c0_0 = arith.constant 0 : index
    %c0_1 = arith.constant 0 : index
    %0 = vector.load %arg2[%c0, %c0_0, %c0_1] : memref<2x4x256xf32, #tpu.memory_space<vmem>>, vector<2x1x256xf32>
    %1 = vector.shape_cast %0 : vector<2x1x256xf32> to vector<2x256xf32>
    %c0_2 = arith.constant 0 : index
    %c1 = arith.constant 1 : index
    %c0_3 = arith.constant 0 : index
    %2 = vector.load %arg2[%c0_2, %c1, %c0_3] : memref<2x4x256xf32, #tpu.memory_space<vmem>>, vector<2x1x256xf32>
    %3 = vector.shape_cast %2 : vector<2x1x256xf32> to vector<2x256xf32>
    %4 = arith.addf %1, %3 : vector<2x256xf32>
    %5 = arith.maximumf %1, %3 : vector<2x256xf32>
    %c0_4 = arith.constant 0 : index
    %c2 = arith.constant 2 : index
    %c0_5 = arith.constant 0 : index
    %6 = vector.load %arg2[%c0_4, %c2, %c0_5] : memref<2x4x256xf32, #tpu.memory_space<vmem>>, vector<2x1x256xf32>
    %7 = vector.shape_cast %6 : vector<2x1x256xf32> to vector<2x256xf32>
    %8 = arith.addf %4, %7 : vector<2x256xf32>
    %9 = arith.maximumf %5, %7 : vector<2x256xf32>
    %c0_6 = arith.constant 0 : index
    %c3 = arith.constant 3 : index
    %c0_7 = arith.constant 0 : index
    %10 = vector.load %arg2[%c0_6, %c3, %c0_7] : memref<2x4x256xf32, #tpu.memory_space<vmem>>, vector<2x1x256xf32>
    %11 = vector.shape_cast %10 : vector<2x1x256xf32> to vector<2x256xf32>
    %12 = arith.addf %8, %11 : vector<2x256xf32>
    %13 = arith.maximumf %9, %11 : vector<2x256xf32>
    %14 = tpu.iota {dimensions = array<i32: 1>} : vector<2x256xi32>
    %c15_i32 = arith.constant 15 : i32
    %15 = vector.broadcast %c15_i32 : i32 to vector<2x256xi32>
    %16 = arith.andi %14, %15 : vector<2x256xi32>
    %c3_i32 = arith.constant 3 : i32
    %17 = tpu.dynamic_rotate %12 by %c3_i32 dim 1 : vector<2x256xf32>, i32 -> vector<2x256xf32>
    %c3_i32_8 = arith.constant 3 : i32
    %18 = tpu.dynamic_rotate %13 by %c3_i32_8 dim 1 : vector<2x256xf32>, i32 -> vector<2x256xf32>
    %c3_i32_9 = arith.constant 3 : i32
    %19 = vector.broadcast %c3_i32_9 : i32 to vector<2x256xi32>
    %20 = arith.cmpi sge, %16, %19 : vector<2x256xi32>
    %cst = arith.constant 0.000000e+00 : f32
    %21 = vector.broadcast %cst : f32 to vector<2x256xf32>
    %22 = arith.select %20, %17, %21 : vector<2x256xi1>, vector<2x256xf32>
    %cst_10 = arith.constant 0.000000e+00 : f32
    %23 = vector.broadcast %cst_10 : f32 to vector<2x256xf32>
    %24 = arith.select %20, %18, %23 : vector<2x256xi1>, vector<2x256xf32>
    %c0_11 = arith.constant 0 : index
    %25 = memref.load %arg1[%c0_11] : memref<98xf32, #tpu.memory_space<smem>>
    %c49 = arith.constant 49 : index
    %26 = memref.load %arg1[%c49] : memref<98xf32, #tpu.memory_space<smem>>
    %27 = vector.broadcast %25 : f32 to vector<2x256xf32>
    %28 = arith.mulf %27, %22 : vector<2x256xf32>
    %29 = vector.broadcast %26 : f32 to vector<2x256xf32>
    %30 = arith.mulf %29, %24 : vector<2x256xf32>
    %31 = arith.addf %28, %30 : vector<2x256xf32>
    %c7 = arith.constant 7 : index
    %32 = memref.load %arg1[%c7] : memref<98xf32, #tpu.memory_space<smem>>
    %c56 = arith.constant 56 : index
    %33 = memref.load %arg1[%c56] : memref<98xf32, #tpu.memory_space<smem>>
    %34 = vector.broadcast %32 : f32 to vector<2x256xf32>
    %35 = arith.mulf %34, %22 : vector<2x256xf32>
    %36 = vector.broadcast %33 : f32 to vector<2x256xf32>
    %37 = arith.mulf %36, %24 : vector<2x256xf32>
    %38 = arith.addf %35, %37 : vector<2x256xf32>
    %c14 = arith.constant 14 : index
    %39 = memref.load %arg1[%c14] : memref<98xf32, #tpu.memory_space<smem>>
    %c63 = arith.constant 63 : index
    %40 = memref.load %arg1[%c63] : memref<98xf32, #tpu.memory_space<smem>>
    %41 = vector.broadcast %39 : f32 to vector<2x256xf32>
    %42 = arith.mulf %41, %22 : vector<2x256xf32>
    %43 = vector.broadcast %40 : f32 to vector<2x256xf32>
    %44 = arith.mulf %43, %24 : vector<2x256xf32>
    %45 = arith.addf %42, %44 : vector<2x256xf32>
    %c21 = arith.constant 21 : index
    %46 = memref.load %arg1[%c21] : memref<98xf32, #tpu.memory_space<smem>>
    %c70 = arith.constant 70 : index
    %47 = memref.load %arg1[%c70] : memref<98xf32, #tpu.memory_space<smem>>
    %48 = vector.broadcast %46 : f32 to vector<2x256xf32>
    %49 = arith.mulf %48, %22 : vector<2x256xf32>
    %50 = vector.broadcast %47 : f32 to vector<2x256xf32>
    %51 = arith.mulf %50, %24 : vector<2x256xf32>
    %52 = arith.addf %49, %51 : vector<2x256xf32>
    %c28 = arith.constant 28 : index
    %53 = memref.load %arg1[%c28] : memref<98xf32, #tpu.memory_space<smem>>
    %c77 = arith.constant 77 : index
    %54 = memref.load %arg1[%c77] : memref<98xf32, #tpu.memory_space<smem>>
    %55 = vector.broadcast %53 : f32 to vector<2x256xf32>
    %56 = arith.mulf %55, %22 : vector<2x256xf32>
    %57 = vector.broadcast %54 : f32 to vector<2x256xf32>
    %58 = arith.mulf %57, %24 : vector<2x256xf32>
    %59 = arith.addf %56, %58 : vector<2x256xf32>
    %c35 = arith.constant 35 : index
    %60 = memref.load %arg1[%c35] : memref<98xf32, #tpu.memory_space<smem>>
    %c84 = arith.constant 84 : index
    %61 = memref.load %arg1[%c84] : memref<98xf32, #tpu.memory_space<smem>>
    %62 = vector.broadcast %60 : f32 to vector<2x256xf32>
    %63 = arith.mulf %62, %22 : vector<2x256xf32>
    %64 = vector.broadcast %61 : f32 to vector<2x256xf32>
    %65 = arith.mulf %64, %24 : vector<2x256xf32>
    %66 = arith.addf %63, %65 : vector<2x256xf32>
    %c42 = arith.constant 42 : index
    %67 = memref.load %arg1[%c42] : memref<98xf32, #tpu.memory_space<smem>>
    %c91 = arith.constant 91 : index
    %68 = memref.load %arg1[%c91] : memref<98xf32, #tpu.memory_space<smem>>
    %69 = vector.broadcast %67 : f32 to vector<2x256xf32>
    %70 = arith.mulf %69, %22 : vector<2x256xf32>
    %71 = vector.broadcast %68 : f32 to vector<2x256xf32>
    %72 = arith.mulf %71, %24 : vector<2x256xf32>
    %73 = arith.addf %70, %72 : vector<2x256xf32>
    %c2_i32 = arith.constant 2 : i32
    %74 = tpu.dynamic_rotate %12 by %c2_i32 dim 1 : vector<2x256xf32>, i32 -> vector<2x256xf32>
    %c2_i32_12 = arith.constant 2 : i32
    %75 = tpu.dynamic_rotate %13 by %c2_i32_12 dim 1 : vector<2x256xf32>, i32 -> vector<2x256xf32>
    %c2_i32_13 = arith.constant 2 : i32
    %76 = vector.broadcast %c2_i32_13 : i32 to vector<2x256xi32>
    %77 = arith.cmpi sge, %16, %76 : vector<2x256xi32>
    %cst_14 = arith.constant 0.000000e+00 : f32
    %78 = vector.broadcast %cst_14 : f32 to vector<2x256xf32>
    %79 = arith.select %77, %74, %78 : vector<2x256xi1>, vector<2x256xf32>
    %cst_15 = arith.constant 0.000000e+00 : f32
    %80 = vector.broadcast %cst_15 : f32 to vector<2x256xf32>
    %81 = arith.select %77, %75, %80 : vector<2x256xi1>, vector<2x256xf32>
    %c1_16 = arith.constant 1 : index
    %82 = memref.load %arg1[%c1_16] : memref<98xf32, #tpu.memory_space<smem>>
    %c50 = arith.constant 50 : index
    %83 = memref.load %arg1[%c50] : memref<98xf32, #tpu.memory_space<smem>>
    %84 = vector.broadcast %82 : f32 to vector<2x256xf32>
    %85 = arith.mulf %84, %79 : vector<2x256xf32>
    %86 = vector.broadcast %83 : f32 to vector<2x256xf32>
    %87 = arith.mulf %86, %81 : vector<2x256xf32>
    %88 = arith.addf %85, %87 : vector<2x256xf32>
    %89 = arith.addf %31, %88 : vector<2x256xf32>
    %c8 = arith.constant 8 : index
    %90 = memref.load %arg1[%c8] : memref<98xf32, #tpu.memory_space<smem>>
    %c57 = arith.constant 57 : index
    %91 = memref.load %arg1[%c57] : memref<98xf32, #tpu.memory_space<smem>>
    %92 = vector.broadcast %90 : f32 to vector<2x256xf32>
    %93 = arith.mulf %92, %79 : vector<2x256xf32>
    %94 = vector.broadcast %91 : f32 to vector<2x256xf32>
    %95 = arith.mulf %94, %81 : vector<2x256xf32>
    %96 = arith.addf %93, %95 : vector<2x256xf32>
    %97 = arith.addf %38, %96 : vector<2x256xf32>
    %c15 = arith.constant 15 : index
    %98 = memref.load %arg1[%c15] : memref<98xf32, #tpu.memory_space<smem>>
    %c64 = arith.constant 64 : index
    %99 = memref.load %arg1[%c64] : memref<98xf32, #tpu.memory_space<smem>>
    %100 = vector.broadcast %98 : f32 to vector<2x256xf32>
    %101 = arith.mulf %100, %79 : vector<2x256xf32>
    %102 = vector.broadcast %99 : f32 to vector<2x256xf32>
    %103 = arith.mulf %102, %81 : vector<2x256xf32>
    %104 = arith.addf %101, %103 : vector<2x256xf32>
    %105 = arith.addf %45, %104 : vector<2x256xf32>
    %c22 = arith.constant 22 : index
    %106 = memref.load %arg1[%c22] : memref<98xf32, #tpu.memory_space<smem>>
    %c71 = arith.constant 71 : index
    %107 = memref.load %arg1[%c71] : memref<98xf32, #tpu.memory_space<smem>>
    %108 = vector.broadcast %106 : f32 to vector<2x256xf32>
    %109 = arith.mulf %108, %79 : vector<2x256xf32>
    %110 = vector.broadcast %107 : f32 to vector<2x256xf32>
    %111 = arith.mulf %110, %81 : vector<2x256xf32>
    %112 = arith.addf %109, %111 : vector<2x256xf32>
    %113 = arith.addf %52, %112 : vector<2x256xf32>
    %c29 = arith.constant 29 : index
    %114 = memref.load %arg1[%c29] : memref<98xf32, #tpu.memory_space<smem>>
    %c78 = arith.constant 78 : index
    %115 = memref.load %arg1[%c78] : memref<98xf32, #tpu.memory_space<smem>>
    %116 = vector.broadcast %114 : f32 to vector<2x256xf32>
    %117 = arith.mulf %116, %79 : vector<2x256xf32>
    %118 = vector.broadcast %115 : f32 to vector<2x256xf32>
    %119 = arith.mulf %118, %81 : vector<2x256xf32>
    %120 = arith.addf %117, %119 : vector<2x256xf32>
    %121 = arith.addf %59, %120 : vector<2x256xf32>
    %c36 = arith.constant 36 : index
    %122 = memref.load %arg1[%c36] : memref<98xf32, #tpu.memory_space<smem>>
    %c85 = arith.constant 85 : index
    %123 = memref.load %arg1[%c85] : memref<98xf32, #tpu.memory_space<smem>>
    %124 = vector.broadcast %122 : f32 to vector<2x256xf32>
    %125 = arith.mulf %124, %79 : vector<2x256xf32>
    %126 = vector.broadcast %123 : f32 to vector<2x256xf32>
    %127 = arith.mulf %126, %81 : vector<2x256xf32>
    %128 = arith.addf %125, %127 : vector<2x256xf32>
    %129 = arith.addf %66, %128 : vector<2x256xf32>
    %c43 = arith.constant 43 : index
    %130 = memref.load %arg1[%c43] : memref<98xf32, #tpu.memory_space<smem>>
    %c92 = arith.constant 92 : index
    %131 = memref.load %arg1[%c92] : memref<98xf32, #tpu.memory_space<smem>>
    %132 = vector.broadcast %130 : f32 to vector<2x256xf32>
    %133 = arith.mulf %132, %79 : vector<2x256xf32>
    %134 = vector.broadcast %131 : f32 to vector<2x256xf32>
    %135 = arith.mulf %134, %81 : vector<2x256xf32>
    %136 = arith.addf %133, %135 : vector<2x256xf32>
    %137 = arith.addf %73, %136 : vector<2x256xf32>
    %c1_i32 = arith.constant 1 : i32
    %138 = tpu.dynamic_rotate %12 by %c1_i32 dim 1 : vector<2x256xf32>, i32 -> vector<2x256xf32>
    %c1_i32_17 = arith.constant 1 : i32
    %139 = tpu.dynamic_rotate %13 by %c1_i32_17 dim 1 : vector<2x256xf32>, i32 -> vector<2x256xf32>
    %c1_i32_18 = arith.constant 1 : i32
    %140 = vector.broadcast %c1_i32_18 : i32 to vector<2x256xi32>
    %141 = arith.cmpi sge, %16, %140 : vector<2x256xi32>
    %cst_19 = arith.constant 0.000000e+00 : f32
    %142 = vector.broadcast %cst_19 : f32 to vector<2x256xf32>
    %143 = arith.select %141, %138, %142 : vector<2x256xi1>, vector<2x256xf32>
    %cst_20 = arith.constant 0.000000e+00 : f32
    %144 = vector.broadcast %cst_20 : f32 to vector<2x256xf32>
    %145 = arith.select %141, %139, %144 : vector<2x256xi1>, vector<2x256xf32>
    %c2_21 = arith.constant 2 : index
    %146 = memref.load %arg1[%c2_21] : memref<98xf32, #tpu.memory_space<smem>>
    %c51 = arith.constant 51 : index
    %147 = memref.load %arg1[%c51] : memref<98xf32, #tpu.memory_space<smem>>
    %148 = vector.broadcast %146 : f32 to vector<2x256xf32>
    %149 = arith.mulf %148, %143 : vector<2x256xf32>
    %150 = vector.broadcast %147 : f32 to vector<2x256xf32>
    %151 = arith.mulf %150, %145 : vector<2x256xf32>
    %152 = arith.addf %149, %151 : vector<2x256xf32>
    %153 = arith.addf %89, %152 : vector<2x256xf32>
    %c9 = arith.constant 9 : index
    %154 = memref.load %arg1[%c9] : memref<98xf32, #tpu.memory_space<smem>>
    %c58 = arith.constant 58 : index
    %155 = memref.load %arg1[%c58] : memref<98xf32, #tpu.memory_space<smem>>
    %156 = vector.broadcast %154 : f32 to vector<2x256xf32>
    %157 = arith.mulf %156, %143 : vector<2x256xf32>
    %158 = vector.broadcast %155 : f32 to vector<2x256xf32>
    %159 = arith.mulf %158, %145 : vector<2x256xf32>
    %160 = arith.addf %157, %159 : vector<2x256xf32>
    %161 = arith.addf %97, %160 : vector<2x256xf32>
    %c16 = arith.constant 16 : index
    %162 = memref.load %arg1[%c16] : memref<98xf32, #tpu.memory_space<smem>>
    %c65 = arith.constant 65 : index
    %163 = memref.load %arg1[%c65] : memref<98xf32, #tpu.memory_space<smem>>
    %164 = vector.broadcast %162 : f32 to vector<2x256xf32>
    %165 = arith.mulf %164, %143 : vector<2x256xf32>
    %166 = vector.broadcast %163 : f32 to vector<2x256xf32>
    %167 = arith.mulf %166, %145 : vector<2x256xf32>
    %168 = arith.addf %165, %167 : vector<2x256xf32>
    %169 = arith.addf %105, %168 : vector<2x256xf32>
    %c23 = arith.constant 23 : index
    %170 = memref.load %arg1[%c23] : memref<98xf32, #tpu.memory_space<smem>>
    %c72 = arith.constant 72 : index
    %171 = memref.load %arg1[%c72] : memref<98xf32, #tpu.memory_space<smem>>
    %172 = vector.broadcast %170 : f32 to vector<2x256xf32>
    %173 = arith.mulf %172, %143 : vector<2x256xf32>
    %174 = vector.broadcast %171 : f32 to vector<2x256xf32>
    %175 = arith.mulf %174, %145 : vector<2x256xf32>
    %176 = arith.addf %173, %175 : vector<2x256xf32>
    %177 = arith.addf %113, %176 : vector<2x256xf32>
    %c30 = arith.constant 30 : index
    %178 = memref.load %arg1[%c30] : memref<98xf32, #tpu.memory_space<smem>>
    %c79 = arith.constant 79 : index
    %179 = memref.load %arg1[%c79] : memref<98xf32, #tpu.memory_space<smem>>
    %180 = vector.broadcast %178 : f32 to vector<2x256xf32>
    %181 = arith.mulf %180, %143 : vector<2x256xf32>
    %182 = vector.broadcast %179 : f32 to vector<2x256xf32>
    %183 = arith.mulf %182, %145 : vector<2x256xf32>
    %184 = arith.addf %181, %183 : vector<2x256xf32>
    %185 = arith.addf %121, %184 : vector<2x256xf32>
    %c37 = arith.constant 37 : index
    %186 = memref.load %arg1[%c37] : memref<98xf32, #tpu.memory_space<smem>>
    %c86 = arith.constant 86 : index
    %187 = memref.load %arg1[%c86] : memref<98xf32, #tpu.memory_space<smem>>
    %188 = vector.broadcast %186 : f32 to vector<2x256xf32>
    %189 = arith.mulf %188, %143 : vector<2x256xf32>
    %190 = vector.broadcast %187 : f32 to vector<2x256xf32>
    %191 = arith.mulf %190, %145 : vector<2x256xf32>
    %192 = arith.addf %189, %191 : vector<2x256xf32>
    %193 = arith.addf %129, %192 : vector<2x256xf32>
    %c44 = arith.constant 44 : index
    %194 = memref.load %arg1[%c44] : memref<98xf32, #tpu.memory_space<smem>>
    %c93 = arith.constant 93 : index
    %195 = memref.load %arg1[%c93] : memref<98xf32, #tpu.memory_space<smem>>
    %196 = vector.broadcast %194 : f32 to vector<2x256xf32>
    %197 = arith.mulf %196, %143 : vector<2x256xf32>
    %198 = vector.broadcast %195 : f32 to vector<2x256xf32>
    %199 = arith.mulf %198, %145 : vector<2x256xf32>
    %200 = arith.addf %197, %199 : vector<2x256xf32>
    %201 = arith.addf %137, %200 : vector<2x256xf32>
    %c3_22 = arith.constant 3 : index
    %202 = memref.load %arg1[%c3_22] : memref<98xf32, #tpu.memory_space<smem>>
    %c52 = arith.constant 52 : index
    %203 = memref.load %arg1[%c52] : memref<98xf32, #tpu.memory_space<smem>>
    %204 = vector.broadcast %202 : f32 to vector<2x256xf32>
    %205 = arith.mulf %204, %12 : vector<2x256xf32>
    %206 = vector.broadcast %203 : f32 to vector<2x256xf32>
    %207 = arith.mulf %206, %13 : vector<2x256xf32>
    %208 = arith.addf %205, %207 : vector<2x256xf32>
    %209 = arith.addf %153, %208 : vector<2x256xf32>
    %c10 = arith.constant 10 : index
    %210 = memref.load %arg1[%c10] : memref<98xf32, #tpu.memory_space<smem>>
    %c59 = arith.constant 59 : index
    %211 = memref.load %arg1[%c59] : memref<98xf32, #tpu.memory_space<smem>>
    %212 = vector.broadcast %210 : f32 to vector<2x256xf32>
    %213 = arith.mulf %212, %12 : vector<2x256xf32>
    %214 = vector.broadcast %211 : f32 to vector<2x256xf32>
    %215 = arith.mulf %214, %13 : vector<2x256xf32>
    %216 = arith.addf %213, %215 : vector<2x256xf32>
    %217 = arith.addf %161, %216 : vector<2x256xf32>
    %c17 = arith.constant 17 : index
    %218 = memref.load %arg1[%c17] : memref<98xf32, #tpu.memory_space<smem>>
    %c66 = arith.constant 66 : index
    %219 = memref.load %arg1[%c66] : memref<98xf32, #tpu.memory_space<smem>>
    %220 = vector.broadcast %218 : f32 to vector<2x256xf32>
    %221 = arith.mulf %220, %12 : vector<2x256xf32>
    %222 = vector.broadcast %219 : f32 to vector<2x256xf32>
    %223 = arith.mulf %222, %13 : vector<2x256xf32>
    %224 = arith.addf %221, %223 : vector<2x256xf32>
    %225 = arith.addf %169, %224 : vector<2x256xf32>
    %c24 = arith.constant 24 : index
    %226 = memref.load %arg1[%c24] : memref<98xf32, #tpu.memory_space<smem>>
    %c73 = arith.constant 73 : index
    %227 = memref.load %arg1[%c73] : memref<98xf32, #tpu.memory_space<smem>>
    %228 = vector.broadcast %226 : f32 to vector<2x256xf32>
    %229 = arith.mulf %228, %12 : vector<2x256xf32>
    %230 = vector.broadcast %227 : f32 to vector<2x256xf32>
    %231 = arith.mulf %230, %13 : vector<2x256xf32>
    %232 = arith.addf %229, %231 : vector<2x256xf32>
    %233 = arith.addf %177, %232 : vector<2x256xf32>
    %c31 = arith.constant 31 : index
    %234 = memref.load %arg1[%c31] : memref<98xf32, #tpu.memory_space<smem>>
    %c80 = arith.constant 80 : index
    %235 = memref.load %arg1[%c80] : memref<98xf32, #tpu.memory_space<smem>>
    %236 = vector.broadcast %234 : f32 to vector<2x256xf32>
    %237 = arith.mulf %236, %12 : vector<2x256xf32>
    %238 = vector.broadcast %235 : f32 to vector<2x256xf32>
    %239 = arith.mulf %238, %13 : vector<2x256xf32>
    %240 = arith.addf %237, %239 : vector<2x256xf32>
    %241 = arith.addf %185, %240 : vector<2x256xf32>
    %c38 = arith.constant 38 : index
    %242 = memref.load %arg1[%c38] : memref<98xf32, #tpu.memory_space<smem>>
    %c87 = arith.constant 87 : index
    %243 = memref.load %arg1[%c87] : memref<98xf32, #tpu.memory_space<smem>>
    %244 = vector.broadcast %242 : f32 to vector<2x256xf32>
    %245 = arith.mulf %244, %12 : vector<2x256xf32>
    %246 = vector.broadcast %243 : f32 to vector<2x256xf32>
    %247 = arith.mulf %246, %13 : vector<2x256xf32>
    %248 = arith.addf %245, %247 : vector<2x256xf32>
    %249 = arith.addf %193, %248 : vector<2x256xf32>
    %c45 = arith.constant 45 : index
    %250 = memref.load %arg1[%c45] : memref<98xf32, #tpu.memory_space<smem>>
    %c94 = arith.constant 94 : index
    %251 = memref.load %arg1[%c94] : memref<98xf32, #tpu.memory_space<smem>>
    %252 = vector.broadcast %250 : f32 to vector<2x256xf32>
    %253 = arith.mulf %252, %12 : vector<2x256xf32>
    %254 = vector.broadcast %251 : f32 to vector<2x256xf32>
    %255 = arith.mulf %254, %13 : vector<2x256xf32>
    %256 = arith.addf %253, %255 : vector<2x256xf32>
    %257 = arith.addf %201, %256 : vector<2x256xf32>
    %c255_i32 = arith.constant 255 : i32
    %258 = tpu.dynamic_rotate %12 by %c255_i32 dim 1 : vector<2x256xf32>, i32 -> vector<2x256xf32>
    %c255_i32_23 = arith.constant 255 : i32
    %259 = tpu.dynamic_rotate %13 by %c255_i32_23 dim 1 : vector<2x256xf32>, i32 -> vector<2x256xf32>
    %c15_i32_24 = arith.constant 15 : i32
    %260 = vector.broadcast %c15_i32_24 : i32 to vector<2x256xi32>
    %261 = arith.cmpi slt, %16, %260 : vector<2x256xi32>
    %cst_25 = arith.constant 0.000000e+00 : f32
    %262 = vector.broadcast %cst_25 : f32 to vector<2x256xf32>
    %263 = arith.select %261, %258, %262 : vector<2x256xi1>, vector<2x256xf32>
    %cst_26 = arith.constant 0.000000e+00 : f32
    %264 = vector.broadcast %cst_26 : f32 to vector<2x256xf32>
    %265 = arith.select %261, %259, %264 : vector<2x256xi1>, vector<2x256xf32>
    %c4 = arith.constant 4 : index
    %266 = memref.load %arg1[%c4] : memref<98xf32, #tpu.memory_space<smem>>
    %c53 = arith.constant 53 : index
    %267 = memref.load %arg1[%c53] : memref<98xf32, #tpu.memory_space<smem>>
    %268 = vector.broadcast %266 : f32 to vector<2x256xf32>
    %269 = arith.mulf %268, %263 : vector<2x256xf32>
    %270 = vector.broadcast %267 : f32 to vector<2x256xf32>
    %271 = arith.mulf %270, %265 : vector<2x256xf32>
    %272 = arith.addf %269, %271 : vector<2x256xf32>
    %273 = arith.addf %209, %272 : vector<2x256xf32>
    %c11 = arith.constant 11 : index
    %274 = memref.load %arg1[%c11] : memref<98xf32, #tpu.memory_space<smem>>
    %c60 = arith.constant 60 : index
    %275 = memref.load %arg1[%c60] : memref<98xf32, #tpu.memory_space<smem>>
    %276 = vector.broadcast %274 : f32 to vector<2x256xf32>
    %277 = arith.mulf %276, %263 : vector<2x256xf32>
    %278 = vector.broadcast %275 : f32 to vector<2x256xf32>
    %279 = arith.mulf %278, %265 : vector<2x256xf32>
    %280 = arith.addf %277, %279 : vector<2x256xf32>
    %281 = arith.addf %217, %280 : vector<2x256xf32>
    %c18 = arith.constant 18 : index
    %282 = memref.load %arg1[%c18] : memref<98xf32, #tpu.memory_space<smem>>
    %c67 = arith.constant 67 : index
    %283 = memref.load %arg1[%c67] : memref<98xf32, #tpu.memory_space<smem>>
    %284 = vector.broadcast %282 : f32 to vector<2x256xf32>
    %285 = arith.mulf %284, %263 : vector<2x256xf32>
    %286 = vector.broadcast %283 : f32 to vector<2x256xf32>
    %287 = arith.mulf %286, %265 : vector<2x256xf32>
    %288 = arith.addf %285, %287 : vector<2x256xf32>
    %289 = arith.addf %225, %288 : vector<2x256xf32>
    %c25 = arith.constant 25 : index
    %290 = memref.load %arg1[%c25] : memref<98xf32, #tpu.memory_space<smem>>
    %c74 = arith.constant 74 : index
    %291 = memref.load %arg1[%c74] : memref<98xf32, #tpu.memory_space<smem>>
    %292 = vector.broadcast %290 : f32 to vector<2x256xf32>
    %293 = arith.mulf %292, %263 : vector<2x256xf32>
    %294 = vector.broadcast %291 : f32 to vector<2x256xf32>
    %295 = arith.mulf %294, %265 : vector<2x256xf32>
    %296 = arith.addf %293, %295 : vector<2x256xf32>
    %297 = arith.addf %233, %296 : vector<2x256xf32>
    %c32 = arith.constant 32 : index
    %298 = memref.load %arg1[%c32] : memref<98xf32, #tpu.memory_space<smem>>
    %c81 = arith.constant 81 : index
    %299 = memref.load %arg1[%c81] : memref<98xf32, #tpu.memory_space<smem>>
    %300 = vector.broadcast %298 : f32 to vector<2x256xf32>
    %301 = arith.mulf %300, %263 : vector<2x256xf32>
    %302 = vector.broadcast %299 : f32 to vector<2x256xf32>
    %303 = arith.mulf %302, %265 : vector<2x256xf32>
    %304 = arith.addf %301, %303 : vector<2x256xf32>
    %305 = arith.addf %241, %304 : vector<2x256xf32>
    %c39 = arith.constant 39 : index
    %306 = memref.load %arg1[%c39] : memref<98xf32, #tpu.memory_space<smem>>
    %c88 = arith.constant 88 : index
    %307 = memref.load %arg1[%c88] : memref<98xf32, #tpu.memory_space<smem>>
    %308 = vector.broadcast %306 : f32 to vector<2x256xf32>
    %309 = arith.mulf %308, %263 : vector<2x256xf32>
    %310 = vector.broadcast %307 : f32 to vector<2x256xf32>
    %311 = arith.mulf %310, %265 : vector<2x256xf32>
    %312 = arith.addf %309, %311 : vector<2x256xf32>
    %313 = arith.addf %249, %312 : vector<2x256xf32>
    %c46 = arith.constant 46 : index
    %314 = memref.load %arg1[%c46] : memref<98xf32, #tpu.memory_space<smem>>
    %c95 = arith.constant 95 : index
    %315 = memref.load %arg1[%c95] : memref<98xf32, #tpu.memory_space<smem>>
    %316 = vector.broadcast %314 : f32 to vector<2x256xf32>
    %317 = arith.mulf %316, %263 : vector<2x256xf32>
    %318 = vector.broadcast %315 : f32 to vector<2x256xf32>
    %319 = arith.mulf %318, %265 : vector<2x256xf32>
    %320 = arith.addf %317, %319 : vector<2x256xf32>
    %321 = arith.addf %257, %320 : vector<2x256xf32>
    %c254_i32 = arith.constant 254 : i32
    %322 = tpu.dynamic_rotate %12 by %c254_i32 dim 1 : vector<2x256xf32>, i32 -> vector<2x256xf32>
    %c254_i32_27 = arith.constant 254 : i32
    %323 = tpu.dynamic_rotate %13 by %c254_i32_27 dim 1 : vector<2x256xf32>, i32 -> vector<2x256xf32>
    %c14_i32 = arith.constant 14 : i32
    %324 = vector.broadcast %c14_i32 : i32 to vector<2x256xi32>
    %325 = arith.cmpi slt, %16, %324 : vector<2x256xi32>
    %cst_28 = arith.constant 0.000000e+00 : f32
    %326 = vector.broadcast %cst_28 : f32 to vector<2x256xf32>
    %327 = arith.select %325, %322, %326 : vector<2x256xi1>, vector<2x256xf32>
    %cst_29 = arith.constant 0.000000e+00 : f32
    %328 = vector.broadcast %cst_29 : f32 to vector<2x256xf32>
    %329 = arith.select %325, %323, %328 : vector<2x256xi1>, vector<2x256xf32>
    %c5 = arith.constant 5 : index
    %330 = memref.load %arg1[%c5] : memref<98xf32, #tpu.memory_space<smem>>
    %c54 = arith.constant 54 : index
    %331 = memref.load %arg1[%c54] : memref<98xf32, #tpu.memory_space<smem>>
    %332 = vector.broadcast %330 : f32 to vector<2x256xf32>
    %333 = arith.mulf %332, %327 : vector<2x256xf32>
    %334 = vector.broadcast %331 : f32 to vector<2x256xf32>
    %335 = arith.mulf %334, %329 : vector<2x256xf32>
    %336 = arith.addf %333, %335 : vector<2x256xf32>
    %337 = arith.addf %273, %336 : vector<2x256xf32>
    %c12 = arith.constant 12 : index
    %338 = memref.load %arg1[%c12] : memref<98xf32, #tpu.memory_space<smem>>
    %c61 = arith.constant 61 : index
    %339 = memref.load %arg1[%c61] : memref<98xf32, #tpu.memory_space<smem>>
    %340 = vector.broadcast %338 : f32 to vector<2x256xf32>
    %341 = arith.mulf %340, %327 : vector<2x256xf32>
    %342 = vector.broadcast %339 : f32 to vector<2x256xf32>
    %343 = arith.mulf %342, %329 : vector<2x256xf32>
    %344 = arith.addf %341, %343 : vector<2x256xf32>
    %345 = arith.addf %281, %344 : vector<2x256xf32>
    %c19 = arith.constant 19 : index
    %346 = memref.load %arg1[%c19] : memref<98xf32, #tpu.memory_space<smem>>
    %c68 = arith.constant 68 : index
    %347 = memref.load %arg1[%c68] : memref<98xf32, #tpu.memory_space<smem>>
    %348 = vector.broadcast %346 : f32 to vector<2x256xf32>
    %349 = arith.mulf %348, %327 : vector<2x256xf32>
    %350 = vector.broadcast %347 : f32 to vector<2x256xf32>
    %351 = arith.mulf %350, %329 : vector<2x256xf32>
    %352 = arith.addf %349, %351 : vector<2x256xf32>
    %353 = arith.addf %289, %352 : vector<2x256xf32>
    %c26 = arith.constant 26 : index
    %354 = memref.load %arg1[%c26] : memref<98xf32, #tpu.memory_space<smem>>
    %c75 = arith.constant 75 : index
    %355 = memref.load %arg1[%c75] : memref<98xf32, #tpu.memory_space<smem>>
    %356 = vector.broadcast %354 : f32 to vector<2x256xf32>
    %357 = arith.mulf %356, %327 : vector<2x256xf32>
    %358 = vector.broadcast %355 : f32 to vector<2x256xf32>
    %359 = arith.mulf %358, %329 : vector<2x256xf32>
    %360 = arith.addf %357, %359 : vector<2x256xf32>
    %361 = arith.addf %297, %360 : vector<2x256xf32>
    %c33 = arith.constant 33 : index
    %362 = memref.load %arg1[%c33] : memref<98xf32, #tpu.memory_space<smem>>
    %c82 = arith.constant 82 : index
    %363 = memref.load %arg1[%c82] : memref<98xf32, #tpu.memory_space<smem>>
    %364 = vector.broadcast %362 : f32 to vector<2x256xf32>
    %365 = arith.mulf %364, %327 : vector<2x256xf32>
    %366 = vector.broadcast %363 : f32 to vector<2x256xf32>
    %367 = arith.mulf %366, %329 : vector<2x256xf32>
    %368 = arith.addf %365, %367 : vector<2x256xf32>
    %369 = arith.addf %305, %368 : vector<2x256xf32>
    %c40 = arith.constant 40 : index
    %370 = memref.load %arg1[%c40] : memref<98xf32, #tpu.memory_space<smem>>
    %c89 = arith.constant 89 : index
    %371 = memref.load %arg1[%c89] : memref<98xf32, #tpu.memory_space<smem>>
    %372 = vector.broadcast %370 : f32 to vector<2x256xf32>
    %373 = arith.mulf %372, %327 : vector<2x256xf32>
    %374 = vector.broadcast %371 : f32 to vector<2x256xf32>
    %375 = arith.mulf %374, %329 : vector<2x256xf32>
    %376 = arith.addf %373, %375 : vector<2x256xf32>
    %377 = arith.addf %313, %376 : vector<2x256xf32>
    %c47 = arith.constant 47 : index
    %378 = memref.load %arg1[%c47] : memref<98xf32, #tpu.memory_space<smem>>
    %c96 = arith.constant 96 : index
    %379 = memref.load %arg1[%c96] : memref<98xf32, #tpu.memory_space<smem>>
    %380 = vector.broadcast %378 : f32 to vector<2x256xf32>
    %381 = arith.mulf %380, %327 : vector<2x256xf32>
    %382 = vector.broadcast %379 : f32 to vector<2x256xf32>
    %383 = arith.mulf %382, %329 : vector<2x256xf32>
    %384 = arith.addf %381, %383 : vector<2x256xf32>
    %385 = arith.addf %321, %384 : vector<2x256xf32>
    %c253_i32 = arith.constant 253 : i32
    %386 = tpu.dynamic_rotate %12 by %c253_i32 dim 1 : vector<2x256xf32>, i32 -> vector<2x256xf32>
    %c253_i32_30 = arith.constant 253 : i32
    %387 = tpu.dynamic_rotate %13 by %c253_i32_30 dim 1 : vector<2x256xf32>, i32 -> vector<2x256xf32>
    %c13_i32 = arith.constant 13 : i32
    %388 = vector.broadcast %c13_i32 : i32 to vector<2x256xi32>
    %389 = arith.cmpi slt, %16, %388 : vector<2x256xi32>
    %cst_31 = arith.constant 0.000000e+00 : f32
    %390 = vector.broadcast %cst_31 : f32 to vector<2x256xf32>
    %391 = arith.select %389, %386, %390 : vector<2x256xi1>, vector<2x256xf32>
    %cst_32 = arith.constant 0.000000e+00 : f32
    %392 = vector.broadcast %cst_32 : f32 to vector<2x256xf32>
    %393 = arith.select %389, %387, %392 : vector<2x256xi1>, vector<2x256xf32>
    %c6 = arith.constant 6 : index
    %394 = memref.load %arg1[%c6] : memref<98xf32, #tpu.memory_space<smem>>
    %c55 = arith.constant 55 : index
    %395 = memref.load %arg1[%c55] : memref<98xf32, #tpu.memory_space<smem>>
    %396 = vector.broadcast %394 : f32 to vector<2x256xf32>
    %397 = arith.mulf %396, %391 : vector<2x256xf32>
    %398 = vector.broadcast %395 : f32 to vector<2x256xf32>
    %399 = arith.mulf %398, %393 : vector<2x256xf32>
    %400 = arith.addf %397, %399 : vector<2x256xf32>
    %401 = arith.addf %337, %400 : vector<2x256xf32>
    %c13 = arith.constant 13 : index
    %402 = memref.load %arg1[%c13] : memref<98xf32, #tpu.memory_space<smem>>
    %c62 = arith.constant 62 : index
    %403 = memref.load %arg1[%c62] : memref<98xf32, #tpu.memory_space<smem>>
    %404 = vector.broadcast %402 : f32 to vector<2x256xf32>
    %405 = arith.mulf %404, %391 : vector<2x256xf32>
    %406 = vector.broadcast %403 : f32 to vector<2x256xf32>
    %407 = arith.mulf %406, %393 : vector<2x256xf32>
    %408 = arith.addf %405, %407 : vector<2x256xf32>
    %409 = arith.addf %345, %408 : vector<2x256xf32>
    %c20 = arith.constant 20 : index
    %410 = memref.load %arg1[%c20] : memref<98xf32, #tpu.memory_space<smem>>
    %c69 = arith.constant 69 : index
    %411 = memref.load %arg1[%c69] : memref<98xf32, #tpu.memory_space<smem>>
    %412 = vector.broadcast %410 : f32 to vector<2x256xf32>
    %413 = arith.mulf %412, %391 : vector<2x256xf32>
    %414 = vector.broadcast %411 : f32 to vector<2x256xf32>
    %415 = arith.mulf %414, %393 : vector<2x256xf32>
    %416 = arith.addf %413, %415 : vector<2x256xf32>
    %417 = arith.addf %353, %416 : vector<2x256xf32>
    %c27 = arith.constant 27 : index
    %418 = memref.load %arg1[%c27] : memref<98xf32, #tpu.memory_space<smem>>
    %c76 = arith.constant 76 : index
    %419 = memref.load %arg1[%c76] : memref<98xf32, #tpu.memory_space<smem>>
    %420 = vector.broadcast %418 : f32 to vector<2x256xf32>
    %421 = arith.mulf %420, %391 : vector<2x256xf32>
    %422 = vector.broadcast %419 : f32 to vector<2x256xf32>
    %423 = arith.mulf %422, %393 : vector<2x256xf32>
    %424 = arith.addf %421, %423 : vector<2x256xf32>
    %425 = arith.addf %361, %424 : vector<2x256xf32>
    %c34 = arith.constant 34 : index
    %426 = memref.load %arg1[%c34] : memref<98xf32, #tpu.memory_space<smem>>
    %c83 = arith.constant 83 : index
    %427 = memref.load %arg1[%c83] : memref<98xf32, #tpu.memory_space<smem>>
    %428 = vector.broadcast %426 : f32 to vector<2x256xf32>
    %429 = arith.mulf %428, %391 : vector<2x256xf32>
    %430 = vector.broadcast %427 : f32 to vector<2x256xf32>
    %431 = arith.mulf %430, %393 : vector<2x256xf32>
    %432 = arith.addf %429, %431 : vector<2x256xf32>
    %433 = arith.addf %369, %432 : vector<2x256xf32>
    %c41 = arith.constant 41 : index
    %434 = memref.load %arg1[%c41] : memref<98xf32, #tpu.memory_space<smem>>
    %c90 = arith.constant 90 : index
    %435 = memref.load %arg1[%c90] : memref<98xf32, #tpu.memory_space<smem>>
    %436 = vector.broadcast %434 : f32 to vector<2x256xf32>
    %437 = arith.mulf %436, %391 : vector<2x256xf32>
    %438 = vector.broadcast %435 : f32 to vector<2x256xf32>
    %439 = arith.mulf %438, %393 : vector<2x256xf32>
    %440 = arith.addf %437, %439 : vector<2x256xf32>
    %441 = arith.addf %377, %440 : vector<2x256xf32>
    %c48 = arith.constant 48 : index
    %442 = memref.load %arg1[%c48] : memref<98xf32, #tpu.memory_space<smem>>
    %c97 = arith.constant 97 : index
    %443 = memref.load %arg1[%c97] : memref<98xf32, #tpu.memory_space<smem>>
    %444 = vector.broadcast %442 : f32 to vector<2x256xf32>
    %445 = arith.mulf %444, %391 : vector<2x256xf32>
    %446 = vector.broadcast %443 : f32 to vector<2x256xf32>
    %447 = arith.mulf %446, %393 : vector<2x256xf32>
    %448 = arith.addf %445, %447 : vector<2x256xf32>
    %449 = arith.addf %385, %448 : vector<2x256xf32>
    %c48_i32 = arith.constant 48 : i32
    %450 = tpu.dynamic_rotate %401 by %c48_i32 dim 1 : vector<2x256xf32>, i32 -> vector<2x256xf32>
    %c48_i32_33 = arith.constant 48 : i32
    %451 = vector.broadcast %c48_i32_33 : i32 to vector<2x256xi32>
    %452 = arith.cmpi sge, %14, %451 : vector<2x256xi32>
    %cst_34 = arith.constant 0.000000e+00 : f32
    %453 = vector.broadcast %cst_34 : f32 to vector<2x256xf32>
    %454 = arith.select %452, %450, %453 : vector<2x256xi1>, vector<2x256xf32>
    %c32_i32 = arith.constant 32 : i32
    %455 = tpu.dynamic_rotate %409 by %c32_i32 dim 1 : vector<2x256xf32>, i32 -> vector<2x256xf32>
    %c32_i32_35 = arith.constant 32 : i32
    %456 = vector.broadcast %c32_i32_35 : i32 to vector<2x256xi32>
    %457 = arith.cmpi sge, %14, %456 : vector<2x256xi32>
    %cst_36 = arith.constant 0.000000e+00 : f32
    %458 = vector.broadcast %cst_36 : f32 to vector<2x256xf32>
    %459 = arith.select %457, %455, %458 : vector<2x256xi1>, vector<2x256xf32>
    %460 = arith.addf %454, %459 : vector<2x256xf32>
    %c16_i32 = arith.constant 16 : i32
    %461 = tpu.dynamic_rotate %417 by %c16_i32 dim 1 : vector<2x256xf32>, i32 -> vector<2x256xf32>
    %c16_i32_37 = arith.constant 16 : i32
    %462 = vector.broadcast %c16_i32_37 : i32 to vector<2x256xi32>
    %463 = arith.cmpi sge, %14, %462 : vector<2x256xi32>
    %cst_38 = arith.constant 0.000000e+00 : f32
    %464 = vector.broadcast %cst_38 : f32 to vector<2x256xf32>
    %465 = arith.select %463, %461, %464 : vector<2x256xi1>, vector<2x256xf32>
    %466 = arith.addf %460, %465 : vector<2x256xf32>
    %467 = arith.addf %466, %425 : vector<2x256xf32>
    %c240_i32 = arith.constant 240 : i32
    %468 = tpu.dynamic_rotate %433 by %c240_i32 dim 1 : vector<2x256xf32>, i32 -> vector<2x256xf32>
    %c240_i32_39 = arith.constant 240 : i32
    %469 = vector.broadcast %c240_i32_39 : i32 to vector<2x256xi32>
    %470 = arith.cmpi slt, %14, %469 : vector<2x256xi32>
    %cst_40 = arith.constant 0.000000e+00 : f32
    %471 = vector.broadcast %cst_40 : f32 to vector<2x256xf32>
    %472 = arith.select %470, %468, %471 : vector<2x256xi1>, vector<2x256xf32>
    %473 = arith.addf %467, %472 : vector<2x256xf32>
    %c224_i32 = arith.constant 224 : i32
    %474 = tpu.dynamic_rotate %441 by %c224_i32 dim 1 : vector<2x256xf32>, i32 -> vector<2x256xf32>
    %c224_i32_41 = arith.constant 224 : i32
    %475 = vector.broadcast %c224_i32_41 : i32 to vector<2x256xi32>
    %476 = arith.cmpi slt, %14, %475 : vector<2x256xi32>
    %cst_42 = arith.constant 0.000000e+00 : f32
    %477 = vector.broadcast %cst_42 : f32 to vector<2x256xf32>
    %478 = arith.select %476, %474, %477 : vector<2x256xi1>, vector<2x256xf32>
    %479 = arith.addf %473, %478 : vector<2x256xf32>
    %c208_i32 = arith.constant 208 : i32
    %480 = tpu.dynamic_rotate %449 by %c208_i32 dim 1 : vector<2x256xf32>, i32 -> vector<2x256xf32>
    %c208_i32_43 = arith.constant 208 : i32
    %481 = vector.broadcast %c208_i32_43 : i32 to vector<2x256xi32>
    %482 = arith.cmpi slt, %14, %481 : vector<2x256xi32>
    %cst_44 = arith.constant 0.000000e+00 : f32
    %483 = vector.broadcast %cst_44 : f32 to vector<2x256xf32>
    %484 = arith.select %482, %480, %483 : vector<2x256xi1>, vector<2x256xf32>
    %485 = arith.addf %479, %484 : vector<2x256xf32>
    %486 = arith.negf %485 : vector<2x256xf32>
    %487 = math.exp %486 : vector<2x256xf32>
    %cst_45 = arith.constant 1.000000e+00 : f32
    %488 = vector.broadcast %cst_45 : f32 to vector<2x256xf32>
    %489 = arith.addf %488, %487 : vector<2x256xf32>
    %490 = arith.divf %488, %489 : vector<2x256xf32>
    %cst_46 = arith.constant 1.000000e+00 : f32
    %491 = vector.broadcast %cst_46 : f32 to vector<2x256xf32>
    %492 = arith.addf %490, %491 : vector<2x256xf32>
    %493 = arith.mulf %485, %492 : vector<2x256xf32>
    %c0_47 = arith.constant 0 : index
    %c0_48 = arith.constant 0 : index
    %494 = vector.load %arg3[%c0_47, %c0_48] : memref<2x256xf32, #tpu.memory_space<vmem>>, vector<2x256xf32>
    tpu.vector_store %arg3[%c0_47, %c0_48], %493 {strides = array<i32>} : memref<2x256xf32, #tpu.memory_space<vmem>>, vector<2x256xf32>,
    return
  }
  func.func @transform_0(%arg0: i32) -> i32 {
    %c0_i32 = arith.constant 0 : i32
    %c0_i32_0 = arith.constant 0 : i32
    return %c0_i32 : i32
  }
  func.func @transform_1(%arg0: i32) -> (i32, i32, i32) {
    %c0_i32 = arith.constant 0 : i32
    %c0_i32_0 = arith.constant 0 : i32
    %c0_i32_1 = arith.constant 0 : i32
    return %arg0, %c0_i32, %c0_i32_0 : i32, i32, i32
  }
  func.func @transform_2(%arg0: i32) -> (i32, i32) {
    %c0_i32 = arith.constant 0 : i32
    %c0_i32_0 = arith.constant 0 : i32
    return %arg0, %c0_i32 : i32, i32
  }
}

</mosaic_0001>

<llo_original>
// kernel: tpu_custom_call.1
$region0: #{tpu_custom_call.1}
  #allocation0 [shape = 'u32[]', space=smem, size = 0x4, offset = 0x4, fixed_abs, tag = 'smem constant byte address 0x4 - core index']
  #allocation1 [shape = 'u32[72,128]{1,0:T(1,128)}', space=vmem, size = 0x9000, scoped, tag = 'internal scratch']
  %s0 = inlined_call_operand.hbm [shape: f32[98], index: 0, kind: input, shape index: {}]
  %s1 = inlined_call_operand.hbm [shape: f32[2,4,256], index: 1, kind: input, shape index: {}]
  %s2 = inlined_call_operand.hbm [shape: f32[2,256], index: 2, kind: output, shape index: {}]
  %s3 = sld [smem:[#allocation0]]
  $region26: #{tpu_custom_call.1} parent=0
    _
  %s5 = ssub.s32 1, %s3
  %s6 = scalar_select 0, %s5, %s3
  $region1: #{tpu_custom_call.1} parent=0
    #allocation2 [shape = 'u8[512]{0}', space=smem, size = 0x200, scoped, tag = 'input window, operand 0, single buffered']
    #allocation3 [shape = 's32[1]{0}', space=sflag, size = 0x4, scoped, tag = 'scoped memory for tpu_custom_call.1']
    #allocation4 [shape = 's32[1]{0}', space=sflag, size = 0x4, scoped, tag = 'scoped memory for tpu_custom_call.1']
    #allocation5 [shape = 's32[1]{0}', space=sflag, size = 0x4, scoped, tag = 'scoped memory for tpu_custom_call.1']
    #allocation6 [shape = 'u8[8192]{0}', space=vmem, size = 0x2000, scoped, tag = 'input window, operand 1, single buffered']
    #allocation7 [shape = 'u8[2048]{0}', space=vmem, size = 0x800, scoped, tag = 'output window, operand 0, single buffered']
    %7 = vsyncpa [#allocation5], 0
    %8 = vsyncpa [#allocation3], 0
    %9 = vsyncpa [#allocation4], 0
    // Predicated region
    $region2: #{tpu_custom_call.1} parent=1 // pred_check
      _
    $region3: #{tpu_custom_call.1} parent=1 // pred_check_branch
      %11 = sbr.rel (0) target = $region5
    $region4: #{tpu_custom_call.1} parent=1 // pred_region
      %13 = vsyncadd [#allocation5], 0
      %s15 = sshll.u32 %s0, 4
      %s16 = int_to_ptr.hbm [resolvable:$true] %s15
      %18 = dma.hbm_to_smem %s16, 16, [#allocation2], [#allocation5]
    $region5: #{tpu_custom_call.1} parent=1 // pred_fallthru
      _
    // Predicated region
    $region6: #{tpu_custom_call.1} parent=1 // pred_check
      _
    $region7: #{tpu_custom_call.1} parent=1 // pred_check_branch
      %20 = sbr.rel (0) target = $region9
    $region8: #{tpu_custom_call.1} parent=1 // pred_region
      %22 = vsyncadd [#allocation3], 0
      %s23 = sshll.u32 %s1, 4
      %s24 = int_to_ptr.hbm [resolvable:$true] %s23
      %s25 = sshll.u32 [#allocation6], 4
      %s26 = int_to_ptr.vmem [resolvable:$true] %s25
      %31 = dma.hbm_to_vmem [thread:$0]  %s24, 256, %s26, [#allocation3], 128, 128, 8
    $region9: #{tpu_custom_call.1} parent=1 // pred_fallthru
      _
    // Predicated region
    $region10: #{tpu_custom_call.1} parent=1 // pred_check
      _
    $region11: #{tpu_custom_call.1} parent=1 // pred_check_branch
      %33 = sbr.rel (0) target = $region13
    $region12: #{tpu_custom_call.1} parent=1 // pred_region
      %35 = dma.done [#allocation5], 16
    $region13: #{tpu_custom_call.1} parent=1 // pred_fallthru
      _
    // Predicated region
    $region14: #{tpu_custom_call.1} parent=1 // pred_check
      _
    $region15: #{tpu_custom_call.1} parent=1 // pred_check_branch
      %37 = sbr.rel (0) target = $region17
    $region16: #{tpu_custom_call.1} parent=1 // pred_region
      %39 = dma.done [#allocation3], 256
    $region17: #{tpu_custom_call.1} parent=1 // pred_fallthru
      _
    %40 = sfence
    %v41 = vld [vmem:[#allocation6] ss:$4 sm:$0x3]
    %s42 = scalar_lea.vmem [#allocation6], 8
    %v43 = vld [vmem:[%s42] ss:$4 sm:$0x3]
    %s44 = scalar_lea.vmem [#allocation6], 1
    %v45 = vld [vmem:[%s44] ss:$4 sm:$0x3]
    %s46 = scalar_lea.vmem [#allocation6], 9
    %v47 = vld [vmem:[%s46] ss:$4 sm:$0x3]
    %v48 = vadd.f32 %v41, %v45
    %v49 = vadd.f32 %v43, %v47
    %v50 = vmax.f32 %v41, %v45
    %v51 = vmax.f32 %v43, %v47
    %s52 = scalar_lea.vmem [#allocation6], 2
    %v53 = vld [vmem:[%s52] ss:$4 sm:$0x3]
    %s54 = scalar_lea.vmem [#allocation6], 10
    %v55 = vld [vmem:[%s54] ss:$4 sm:$0x3]
    %v56 = vadd.f32 %v48, %v53
    %v57 = vadd.f32 %v49, %v55
    %v58 = vmax.f32 %v50, %v53
    %v59 = vmax.f32 %v51, %v55
    %s60 = scalar_lea.vmem [#allocation6], 3
    %v61 = vld [vmem:[%s60] ss:$4 sm:$0x3]
    %s62 = scalar_lea.vmem [#allocation6], 11
    %v63 = vld [vmem:[%s62] ss:$4 sm:$0x3]
    %v64 = vadd.f32 %v56, %v61
    %v65 = vadd.f32 %v57, %v63
    %v66 = vmax.f32 %v58, %v61
    %v67 = vmax.f32 %v59, %v63
    %v68 = vlaneseq
    %v69 = vand.u32 %v68, 127
    %v70 = vadd.s32 %v69, 128
    %v71 = vand.u32 %v69, 15
    %v72 = vand.u32 %v70, 15
    %75 = vst [vmem:[#allocation1] ss:$9 sm:$0xff] %v64
    %s76 = scalar_lea.vmem [#allocation1], 1
    %77 = vst [vmem:[%s76] ss:$9 sm:$0xff] %v65
    %v78 = vld [vmem:[#allocation1] sm:$0xff]
    %v79 = vld [vmem:[#allocation1 + $0x9] sm:$0xff]
    %82 = vrot.lane.b32.xlu0 %v78, 3
    %v83 = vpop.permute.xlu0 %82
    %84 = vrot.lane.b32.xlu0 %v79, 3
    %v85 = vpop.permute.xlu0 %84
    %vm86 = vcmp.lt.s32.totalorder %v69, 3
    %v87 = vsel %vm86, %v83, %v85
    %v88 = vsel %vm86, %v85, %v83
    %91 = vst [vmem:[#allocation1] ss:$9 sm:$0xff] %v66
    %s92 = scalar_lea.vmem [#allocation1], 1
    %93 = vst [vmem:[%s92] ss:$9 sm:$0xff] %v67
    %v94 = vld [vmem:[#allocation1] sm:$0xff]
    %v95 = vld [vmem:[#allocation1 + $0x9] sm:$0xff]
    %98 = vrot.lane.b32.xlu0 %v94, 3
    %v99 = vpop.permute.xlu0 %98
    %100 = vrot.lane.b32.xlu0 %v95, 3
    %v101 = vpop.permute.xlu0 %100
    %v102 = vsel %vm86, %v99, %v101
    %v103 = vsel %vm86, %v101, %v99
    %vm104 = vcmp.ge.s32.totalorder %v71, 3
    %vm105 = vcmp.ge.s32.totalorder %v72, 3
    %v106 = vsel %vm104, %v88, 0.0
    %v107 = vsel %vm105, %v87, 0.0
    %v108 = vsel %vm104, %v103, 0.0
    %v109 = vsel %vm105, %v102, 0.0
    %s110 = sld [smem:[#allocation2]]
    %s111 = sld [smem:[#allocation2 + $0x31]]
    %v112 = vstv %s110
    %v113 = vmul.f32 %v112, %v106
    %v114 = vmul.f32 %v112, %v107
    %v115 = vstv %s111
    %v116 = vmul.f32 %v115, %v108
    %v117 = vmul.f32 %v115, %v109
    %v118 = vadd.f32 %v113, %v116
    %v119 = vadd.f32 %v114, %v117
    %s120 = sld [smem:[#allocation2 + $0x7]]
    %s121 = sld [smem:[#allocation2 + $0x38]]
    %v122 = vstv %s120
    %v123 = vmul.f32 %v122, %v106
    %v124 = vmul.f32 %v122, %v107
    %v125 = vstv %s121
    %v126 = vmul.f32 %v125, %v108
    %v127 = vmul.f32 %v125, %v109
    %v128 = vadd.f32 %v123, %v126
    %v129 = vadd.f32 %v124, %v127
    %s130 = sld [smem:[#allocation2 + $0xe]]
    %s131 = sld [smem:[#allocation2 + $0x3f]]
    %v132 = vstv %s130
    %v133 = vmul.f32 %v132, %v106
    %v134 = vmul.f32 %v132, %v107
    %v135 = vstv %s131
    %v136 = vmul.f32 %v135, %v108
    %v137 = vmul.f32 %v135, %v109
    %v138 = vadd.f32 %v133, %v136
    %v139 = vadd.f32 %v134, %v137
    %s140 = sld [smem:[#allocation2 + $0x15]]
    %s141 = sld [smem:[#allocation2 + $0x46]]
    %v142 = vstv %s140
    %v143 = vmul.f32 %v142, %v106
    %v144 = vmul.f32 %v142, %v107
    %v145 = vstv %s141
    %v146 = vmul.f32 %v145, %v108
    %v147 = vmul.f32 %v145, %v109
    %v148 = vadd.f32 %v143, %v146
    %v149 = vadd.f32 %v144, %v147
    %s150 = sld [smem:[#allocation2 + $0x1c]]
    %s151 = sld [smem:[#allocation2 + $0x4d]]
    %v152 = vstv %s150
    %v153 = vmul.f32 %v152, %v106
    %v154 = vmul.f32 %v152, %v107
    %v155 = vstv %s151
    %v156 = vmul.f32 %v155, %v108
    %v157 = vmul.f32 %v155, %v109
    %v158 = vadd.f32 %v153, %v156
    %v159 = vadd.f32 %v154, %v157
    %s160 = sld [smem:[#allocation2 + $0x23]]
    %s161 = sld [smem:[#allocation2 + $0x54]]
    %v162 = vstv %s160
    %v163 = vmul.f32 %v162, %v106
    %v164 = vmul.f32 %v162, %v107
    %v165 = vstv %s161
    %v166 = vmul.f32 %v165, %v108
    %v167 = vmul.f32 %v165, %v109
    %v168 = vadd.f32 %v163, %v166
    %v169 = vadd.f32 %v164, %v167
    %s170 = sld [smem:[#allocation2 + $0x2a]]
    %s171 = sld [smem:[#allocation2 + $0x5b]]
    %v172 = vstv %s170
    %v173 = vmul.f32 %v172, %v106
    %v174 = vmul.f32 %v172, %v107
    %v175 = vstv %s171
    %v176 = vmul.f32 %v175, %v108
    %v177 = vmul.f32 %v175, %v109
    %v178 = vadd.f32 %v173, %v176
    %v179 = vadd.f32 %v174, %v177
    %180 = vst [vmem:[#allocation1] ss:$9 sm:$0xff] %v64
    %s181 = scalar_lea.vmem [#allocation1], 1
    %182 = vst [vmem:[%s181] ss:$9 sm:$0xff] %v65
    %v183 = vld [vmem:[#allocation1] sm:$0xff]
    %v184 = vld [vmem:[#allocation1 + $0x9] sm:$0xff]
    %187 = vrot.lane.b32.xlu0 %v183, 2
    %v188 = vpop.permute.xlu0 %187
    %189 = vrot.lane.b32.xlu0 %v184, 2
    %v190 = vpop.permute.xlu0 %189
    %vm191 = vcmp.lt.s32.totalorder %v69, 2
    %v192 = vsel %vm191, %v188, %v190
    %v193 = vsel %vm191, %v190, %v188
    %194 = vst [vmem:[#allocation1] ss:$9 sm:$0xff] %v66
    %s195 = scalar_lea.vmem [#allocation1], 1
    %196 = vst [vmem:[%s195] ss:$9 sm:$0xff] %v67
    %v197 = vld [vmem:[#allocation1] sm:$0xff]
    %v198 = vld [vmem:[#allocation1 + $0x9] sm:$0xff]
    %201 = vrot.lane.b32.xlu0 %v197, 2
    %v202 = vpop.permute.xlu0 %201
    %203 = vrot.lane.b32.xlu0 %v198, 2
    %v204 = vpop.permute.xlu0 %203
    %v205 = vsel %vm191, %v202, %v204
    %v206 = vsel %vm191, %v204, %v202
    %vm207 = vcmp.ge.s32.totalorder %v71, 2
    %vm208 = vcmp.ge.s32.totalorder %v72, 2
    %v209 = vsel %vm207, %v193, 0.0
    %v210 = vsel %vm208, %v192, 0.0
    %v211 = vsel %vm207, %v206, 0.0
    %v212 = vsel %vm208, %v205, 0.0
    %s213 = sld [smem:[#allocation2 + $0x1]]
    %s214 = sld [smem:[#allocation2 + $0x32]]
    %v215 = vstv %s213
    %v216 = vmul.f32 %v215, %v209
    %v217 = vmul.f32 %v215, %v210
    %v218 = vstv %s214
    %v219 = vmul.f32 %v218, %v211
    %v220 = vmul.f32 %v218, %v212
    %v221 = vadd.f32 %v216, %v219
    %v222 = vadd.f32 %v217, %v220
    %v223 = vadd.f32 %v118, %v221
    %v224 = vadd.f32 %v119, %v222
    %s225 = sld [smem:[#allocation2 + $0x8]]
    %s226 = sld [smem:[#allocation2 + $0x39]]
    %v227 = vstv %s225
    %v228 = vmul.f32 %v227, %v209
    %v229 = vmul.f32 %v227, %v210
    %v230 = vstv %s226
    %v231 = vmul.f32 %v230, %v211
    %v232 = vmul.f32 %v230, %v212
    %v233 = vadd.f32 %v228, %v231
    %v234 = vadd.f32 %v229, %v232
    %v235 = vadd.f32 %v128, %v233
    %v236 = vadd.f32 %v129, %v234
    %s237 = sld [smem:[#allocation2 + $0xf]]
    %s238 = sld [smem:[#allocation2 + $0x40]]
    %v239 = vstv %s237
    %v240 = vmul.f32 %v239, %v209
    %v241 = vmul.f32 %v239, %v210
    %v242 = vstv %s238
    %v243 = vmul.f32 %v242, %v211
    %v244 = vmul.f32 %v242, %v212
    %v245 = vadd.f32 %v240, %v243
    %v246 = vadd.f32 %v241, %v244
    %v247 = vadd.f32 %v138, %v245
    %v248 = vadd.f32 %v139, %v246
    %s249 = sld [smem:[#allocation2 + $0x16]]
    %s250 = sld [smem:[#allocation2 + $0x47]]
    %v251 = vstv %s249
    %v252 = vmul.f32 %v251, %v209
    %v253 = vmul.f32 %v251, %v210
    %v254 = vstv %s250
    %v255 = vmul.f32 %v254, %v211
    %v256 = vmul.f32 %v254, %v212
    %v257 = vadd.f32 %v252, %v255
    %v258 = vadd.f32 %v253, %v256
    %v259 = vadd.f32 %v148, %v257
    %v260 = vadd.f32 %v149, %v258
    %s261 = sld [smem:[#allocation2 + $0x1d]]
    %s262 = sld [smem:[#allocation2 + $0x4e]]
    %v263 = vstv %s261
    %v264 = vmul.f32 %v263, %v209
    %v265 = vmul.f32 %v263, %v210
    %v266 = vstv %s262
    %v267 = vmul.f32 %v266, %v211
    %v268 = vmul.f32 %v266, %v212
    %v269 = vadd.f32 %v264, %v267
    %v270 = vadd.f32 %v265, %v268
    %v271 = vadd.f32 %v158, %v269
    %v272 = vadd.f32 %v159, %v270
    %s273 = sld [smem:[#allocation2 + $0x24]]
    %s274 = sld [smem:[#allocation2 + $0x55]]
    %v275 = vstv %s273
    %v276 = vmul.f32 %v275, %v209
    %v277 = vmul.f32 %v275, %v210
    %v278 = vstv %s274
    %v279 = vmul.f32 %v278, %v211
    %v280 = vmul.f32 %v278, %v212
    %v281 = vadd.f32 %v276, %v279
    %v282 = vadd.f32 %v277, %v280
    %v283 = vadd.f32 %v168, %v281
    %v284 = vadd.f32 %v169, %v282
    %s285 = sld [smem:[#allocation2 + $0x2b]]
    %s286 = sld [smem:[#allocation2 + $0x5c]]
    %v287 = vstv %s285
    %v288 = vmul.f32 %v287, %v209
    %v289 = vmul.f32 %v287, %v210
    %v290 = vstv %s286
    %v291 = vmul.f32 %v290, %v211
    %v292 = vmul.f32 %v290, %v212
    %v293 = vadd.f32 %v288, %v291
    %v294 = vadd.f32 %v289, %v292
    %v295 = vadd.f32 %v178, %v293
    %v296 = vadd.f32 %v179, %v294
    %297 = vst [vmem:[#allocation1] ss:$9 sm:$0xff] %v64
    %s298 = scalar_lea.vmem [#allocation1], 1
    %299 = vst [vmem:[%s298] ss:$9 sm:$0xff] %v65
    %v300 = vld [vmem:[#allocation1] sm:$0xff]
    %v301 = vld [vmem:[#allocation1 + $0x9] sm:$0xff]
    %304 = vrot.lane.b32.xlu0 %v300, 1
    %v305 = vpop.permute.xlu0 %304
    %306 = vrot.lane.b32.xlu0 %v301, 1
    %v307 = vpop.permute.xlu0 %306
    %vm308 = vcmp.lt.s32.totalorder %v69, 1
    %v309 = vsel %vm308, %v305, %v307
    %v310 = vsel %vm308, %v307, %v305
    %311 = vst [vmem:[#allocation1] ss:$9 sm:$0xff] %v66
    %s312 = scalar_lea.vmem [#allocation1], 1
    %313 = vst [vmem:[%s312] ss:$9 sm:$0xff] %v67
    %v314 = vld [vmem:[#allocation1] sm:$0xff]
    %v315 = vld [vmem:[#allocation1 + $0x9] sm:$0xff]
    %318 = vrot.lane.b32.xlu0 %v314, 1
    %v319 = vpop.permute.xlu0 %318
    %320 = vrot.lane.b32.xlu0 %v315, 1
    %v321 = vpop.permute.xlu0 %320
    %v322 = vsel %vm308, %v319, %v321
    %v323 = vsel %vm308, %v321, %v319
    %vm324 = vcmp.ge.s32.totalorder %v71, 1
    %vm325 = vcmp.ge.s32.totalorder %v72, 1
    %v326 = vsel %vm324, %v310, 0.0
    %v327 = vsel %vm325, %v309, 0.0
    %v328 = vsel %vm324, %v323, 0.0
    %v329 = vsel %vm325, %v322, 0.0
    %s330 = sld [smem:[#allocation2 + $0x2]]
    %s331 = sld [smem:[#allocation2 + $0x33]]
    %v332 = vstv %s330
    %v333 = vmul.f32 %v332, %v326
    %v334 = vmul.f32 %v332, %v327
    %v335 = vstv %s331
    %v336 = vmul.f32 %v335, %v328
    %v337 = vmul.f32 %v335, %v329
    %v338 = vadd.f32 %v333, %v336
    %v339 = vadd.f32 %v334, %v337
    %v340 = vadd.f32 %v223, %v338
    %v341 = vadd.f32 %v224, %v339
    %s342 = sld [smem:[#allocation2 + $0x9]]
    %s343 = sld [smem:[#allocation2 + $0x3a]]
    %v344 = vstv %s342
    %v345 = vmul.f32 %v344, %v326
    %v346 = vmul.f32 %v344, %v327
    %v347 = vstv %s343
    %v348 = vmul.f32 %v347, %v328
    %v349 = vmul.f32 %v347, %v329
    %v350 = vadd.f32 %v345, %v348
    %v351 = vadd.f32 %v346, %v349
    %v352 = vadd.f32 %v235, %v350
    %v353 = vadd.f32 %v236, %v351
    %s354 = sld [smem:[#allocation2 + $0x10]]
    %s355 = sld [smem:[#allocation2 + $0x41]]
    %v356 = vstv %s354
    %v357 = vmul.f32 %v356, %v326
    %v358 = vmul.f32 %v356, %v327
    %v359 = vstv %s355
    %v360 = vmul.f32 %v359, %v328
    %v361 = vmul.f32 %v359, %v329
    %v362 = vadd.f32 %v357, %v360
    %v363 = vadd.f32 %v358, %v361
    %v364 = vadd.f32 %v247, %v362
    %v365 = vadd.f32 %v248, %v363
    %s366 = sld [smem:[#allocation2 + $0x17]]
    %s367 = sld [smem:[#allocation2 + $0x48]]
    %v368 = vstv %s366
    %v369 = vmul.f32 %v368, %v326
    %v370 = vmul.f32 %v368, %v327
    %v371 = vstv %s367
    %v372 = vmul.f32 %v371, %v328
    %v373 = vmul.f32 %v371, %v329
    %v374 = vadd.f32 %v369, %v372
    %v375 = vadd.f32 %v370, %v373
    %v376 = vadd.f32 %v259, %v374
    %v377 = vadd.f32 %v260, %v375
    %s378 = sld [smem:[#allocation2 + $0x1e]]
    %s379 = sld [smem:[#allocation2 + $0x4f]]
    %v380 = vstv %s378
    %v381 = vmul.f32 %v380, %v326
    %v382 = vmul.f32 %v380, %v327
    %v383 = vstv %s379
    %v384 = vmul.f32 %v383, %v328
    %v385 = vmul.f32 %v383, %v329
    %v386 = vadd.f32 %v381, %v384
    %v387 = vadd.f32 %v382, %v385
    %v388 = vadd.f32 %v271, %v386
    %v389 = vadd.f32 %v272, %v387
    %s390 = sld [smem:[#allocation2 + $0x25]]
    %s391 = sld [smem:[#allocation2 + $0x56]]
    %v392 = vstv %s390
    %v393 = vmul.f32 %v392, %v326
    %v394 = vmul.f32 %v392, %v327
    %v395 = vstv %s391
    %v396 = vmul.f32 %v395, %v328
    %v397 = vmul.f32 %v395, %v329
    %v398 = vadd.f32 %v393, %v396
    %v399 = vadd.f32 %v394, %v397
    %v400 = vadd.f32 %v283, %v398
    %v401 = vadd.f32 %v284, %v399
    %s402 = sld [smem:[#allocation2 + $0x2c]]
    %s403 = sld [smem:[#allocation2 + $0x5d]]
    %v404 = vstv %s402
    %v405 = vmul.f32 %v404, %v326
    %v406 = vmul.f32 %v404, %v327
    %v407 = vstv %s403
    %v408 = vmul.f32 %v407, %v328
    %v409 = vmul.f32 %v407, %v329
    %v410 = vadd.f32 %v405, %v408
    %v411 = vadd.f32 %v406, %v409
    %v412 = vadd.f32 %v295, %v410
    %v413 = vadd.f32 %v296, %v411
    %s414 = sld [smem:[#allocation2 + $0x3]]
    %s415 = sld [smem:[#allocation2 + $0x34]]
    %v416 = vstv %s414
    %v417 = vmul.f32 %v416, %v64
    %v418 = vmul.f32 %v416, %v65
    %v419 = vstv %s415
    %v420 = vmul.f32 %v419, %v66
    %v421 = vmul.f32 %v419, %v67
    %v422 = vadd.f32 %v417, %v420
    %v423 = vadd.f32 %v418, %v421
    %426 = vst [vmem:[#allocation1] ss:$9 sm:$0xff] %v422
    %s427 = scalar_lea.vmem [#allocation1], 1
    %428 = vst [vmem:[%s427] ss:$9 sm:$0xff] %v423
    %v429 = vld [vmem:[#allocation1] sm:$0xff]
    %v430 = vld [vmem:[#allocation1 + $0x9] sm:$0xff]
    %v433 = vadd.f32 %v340, %v429
    %v434 = vadd.f32 %v341, %v430
    %s435 = sld [smem:[#allocation2 + $0xa]]
    %s436 = sld [smem:[#allocation2 + $0x3b]]
    %v437 = vstv %s435
    %v438 = vmul.f32 %v437, %v64
    %v439 = vmul.f32 %v437, %v65
    %v440 = vstv %s436
    %v441 = vmul.f32 %v440, %v66
    %v442 = vmul.f32 %v440, %v67
    %v443 = vadd.f32 %v438, %v441
    %v444 = vadd.f32 %v439, %v442
    %447 = vst [vmem:[#allocation1] ss:$9 sm:$0xff] %v443
    %s448 = scalar_lea.vmem [#allocation1], 1
    %449 = vst [vmem:[%s448] ss:$9 sm:$0xff] %v444
    %v450 = vld [vmem:[#allocation1] sm:$0xff]
    %v451 = vld [vmem:[#allocation1 + $0x9] sm:$0xff]
    %v454 = vadd.f32 %v352, %v450
    %v455 = vadd.f32 %v353, %v451
    %s456 = sld [smem:[#allocation2 + $0x11]]
    %s457 = sld [smem:[#allocation2 + $0x42]]
    %v458 = vstv %s456
    %v459 = vmul.f32 %v458, %v64
    %v460 = vmul.f32 %v458, %v65
    %v461 = vstv %s457
    %v462 = vmul.f32 %v461, %v66
    %v463 = vmul.f32 %v461, %v67
    %v464 = vadd.f32 %v459, %v462
    %v465 = vadd.f32 %v460, %v463
    %468 = vst [vmem:[#allocation1] ss:$9 sm:$0xff] %v464
    %s469 = scalar_lea.vmem [#allocation1], 1
    %470 = vst [vmem:[%s469] ss:$9 sm:$0xff] %v465
    %v471 = vld [vmem:[#allocation1] sm:$0xff]
    %v472 = vld [vmem:[#allocation1 + $0x9] sm:$0xff]
    %v475 = vadd.f32 %v364, %v471
    %v476 = vadd.f32 %v365, %v472
    %s477 = sld [smem:[#allocation2 + $0x18]]
    %s478 = sld [smem:[#allocation2 + $0x49]]
    %v479 = vstv %s477
    %v480 = vmul.f32 %v479, %v64
    %v481 = vmul.f32 %v479, %v65
    %v482 = vstv %s478
    %v483 = vmul.f32 %v482, %v66
    %v484 = vmul.f32 %v482, %v67
    %v485 = vadd.f32 %v480, %v483
    %v486 = vadd.f32 %v481, %v484
    %489 = vst [vmem:[#allocation1] ss:$9 sm:$0xff] %v485
    %s490 = scalar_lea.vmem [#allocation1], 1
    %491 = vst [vmem:[%s490] ss:$9 sm:$0xff] %v486
    %v492 = vld [vmem:[#allocation1] sm:$0xff]
    %v493 = vld [vmem:[#allocation1 + $0x9] sm:$0xff]
    %v496 = vadd.f32 %v376, %v492
    %v497 = vadd.f32 %v377, %v493
    %s498 = sld [smem:[#allocation2 + $0x1f]]
    %s499 = sld [smem:[#allocation2 + $0x50]]
    %v500 = vstv %s498
    %v501 = vmul.f32 %v500, %v64
    %v502 = vmul.f32 %v500, %v65
    %v503 = vstv %s499
    %v504 = vmul.f32 %v503, %v66
    %v505 = vmul.f32 %v503, %v67
    %v506 = vadd.f32 %v501, %v504
    %v507 = vadd.f32 %v502, %v505
    %510 = vst [vmem:[#allocation1] ss:$9 sm:$0xff] %v506
    %s511 = scalar_lea.vmem [#allocation1], 1
    %512 = vst [vmem:[%s511] ss:$9 sm:$0xff] %v507
    %v513 = vld [vmem:[#allocation1] sm:$0xff]
    %v514 = vld [vmem:[#allocation1 + $0x9] sm:$0xff]
    %v517 = vadd.f32 %v388, %v513
    %v518 = vadd.f32 %v389, %v514
    %s519 = sld [smem:[#allocation2 + $0x26]]
    %s520 = sld [smem:[#allocation2 + $0x57]]
    %v521 = vstv %s519
    %v522 = vmul.f32 %v521, %v64
    %v523 = vmul.f32 %v521, %v65
    %v524 = vstv %s520
    %v525 = vmul.f32 %v524, %v66
    %v526 = vmul.f32 %v524, %v67
    %v527 = vadd.f32 %v522, %v525
    %v528 = vadd.f32 %v523, %v526
    %531 = vst [vmem:[#allocation1] ss:$9 sm:$0xff] %v527
    %s532 = scalar_lea.vmem [#allocation1], 1
    %533 = vst [vmem:[%s532] ss:$9 sm:$0xff] %v528
    %v534 = vld [vmem:[#allocation1] sm:$0xff]
    %v535 = vld [vmem:[#allocation1 + $0x9] sm:$0xff]
    %v538 = vadd.f32 %v400, %v534
    %v539 = vadd.f32 %v401, %v535
    %s540 = sld [smem:[#allocation2 + $0x2d]]
    %s541 = sld [smem:[#allocation2 + $0x5e]]
    %v542 = vstv %s540
    %v543 = vmul.f32 %v542, %v64
    %v544 = vmul.f32 %v542, %v65
    %v545 = vstv %s541
    %v546 = vmul.f32 %v545, %v66
    %v547 = vmul.f32 %v545, %v67
    %v548 = vadd.f32 %v543, %v546
    %v549 = vadd.f32 %v544, %v547
    %552 = vst [vmem:[#allocation1] ss:$9 sm:$0xff] %v548
    %s553 = scalar_lea.vmem [#allocation1], 1
    %554 = vst [vmem:[%s553] ss:$9 sm:$0xff] %v549
    %v555 = vld [vmem:[#allocation1] sm:$0xff]
    %v556 = vld [vmem:[#allocation1 + $0x9] sm:$0xff]
    %v559 = vadd.f32 %v412, %v555
    %v560 = vadd.f32 %v413, %v556
    %561 = vst [vmem:[#allocation1] ss:$9 sm:$0xff] %v64
    %s562 = scalar_lea.vmem [#allocation1], 1
    %563 = vst [vmem:[%s562] ss:$9 sm:$0xff] %v65
    %v564 = vld [vmem:[#allocation1] sm:$0xff]
    %v565 = vld [vmem:[#allocation1 + $0x9] sm:$0xff]
    %568 = vrot.lane.b32.xlu0 %v564, 127
    %v569 = vpop.permute.xlu0 %568
    %570 = vrot.lane.b32.xlu0 %v565, 127
    %v571 = vpop.permute.xlu0 %570
    %vm572 = vcmp.lt.s32.totalorder %v69, 127
    %v573 = vsel %vm572, %v569, %v571
    %v574 = vsel %vm572, %v571, %v569
    %575 = vst [vmem:[#allocation1] ss:$9 sm:$0xff] %v66
    %s576 = scalar_lea.vmem [#allocation1], 1
    %577 = vst [vmem:[%s576] ss:$9 sm:$0xff] %v67
    %v578 = vld [vmem:[#allocation1] sm:$0xff]
    %v579 = vld [vmem:[#allocation1 + $0x9] sm:$0xff]
    %582 = vrot.lane.b32.xlu0 %v578, 127
    %v583 = vpop.permute.xlu0 %582
    %584 = vrot.lane.b32.xlu0 %v579, 127
    %v585 = vpop.permute.xlu0 %584
    %v586 = vsel %vm572, %v583, %v585
    %v587 = vsel %vm572, %v585, %v583
    %vm588 = vcmp.lt.s32.totalorder %v71, 15
    %vm589 = vcmp.lt.s32.totalorder %v72, 15
    %v590 = vsel %vm588, %v573, 0.0
    %v591 = vsel %vm589, %v574, 0.0
    %v592 = vsel %vm588, %v586, 0.0
    %v593 = vsel %vm589, %v587, 0.0
    %s594 = sld [smem:[#allocation2 + $0x4]]
    %s595 = sld [smem:[#allocation2 + $0x35]]
    %v596 = vstv %s594
    %v597 = vmul.f32 %v596, %v590
    %v598 = vmul.f32 %v596, %v591
    %v599 = vstv %s595
    %v600 = vmul.f32 %v599, %v592
    %v601 = vmul.f32 %v599, %v593
    %v602 = vadd.f32 %v597, %v600
    %v603 = vadd.f32 %v598, %v601
    %v604 = vadd.f32 %v433, %v602
    %v605 = vadd.f32 %v434, %v603
    %s606 = sld [smem:[#allocation2 + $0xb]]
    %s607 = sld [smem:[#allocation2 + $0x3c]]
    %v608 = vstv %s606
    %v609 = vmul.f32 %v608, %v590
    %v610 = vmul.f32 %v608, %v591
    %v611 = vstv %s607
    %v612 = vmul.f32 %v611, %v592
    %v613 = vmul.f32 %v611, %v593
    %v614 = vadd.f32 %v609, %v612
    %v615 = vadd.f32 %v610, %v613
    %v616 = vadd.f32 %v454, %v614
    %v617 = vadd.f32 %v455, %v615
    %s618 = sld [smem:[#allocation2 + $0x12]]
    %s619 = sld [smem:[#allocation2 + $0x43]]
    %v620 = vstv %s618
    %v621 = vmul.f32 %v620, %v590
    %v622 = vmul.f32 %v620, %v591
    %v623 = vstv %s619
    %v624 = vmul.f32 %v623, %v592
    %v625 = vmul.f32 %v623, %v593
    %v626 = vadd.f32 %v621, %v624
    %v627 = vadd.f32 %v622, %v625
    %v628 = vadd.f32 %v475, %v626
    %v629 = vadd.f32 %v476, %v627
    %s630 = sld [smem:[#allocation2 + $0x19]]
    %s631 = sld [smem:[#allocation2 + $0x4a]]
    %v632 = vstv %s630
    %v633 = vmul.f32 %v632, %v590
    %v634 = vmul.f32 %v632, %v591
    %v635 = vstv %s631
    %v636 = vmul.f32 %v635, %v592
    %v637 = vmul.f32 %v635, %v593
    %v638 = vadd.f32 %v633, %v636
    %v639 = vadd.f32 %v634, %v637
    %v640 = vadd.f32 %v496, %v638
    %v641 = vadd.f32 %v497, %v639
    %s642 = sld [smem:[#allocation2 + $0x20]]
    %s643 = sld [smem:[#allocation2 + $0x51]]
    %v644 = vstv %s642
    %v645 = vmul.f32 %v644, %v590
    %v646 = vmul.f32 %v644, %v591
    %v647 = vstv %s643
    %v648 = vmul.f32 %v647, %v592
    %v649 = vmul.f32 %v647, %v593
    %v650 = vadd.f32 %v645, %v648
    %v651 = vadd.f32 %v646, %v649
    %v652 = vadd.f32 %v517, %v650
    %v653 = vadd.f32 %v518, %v651
    %s654 = sld [smem:[#allocation2 + $0x27]]
    %s655 = sld [smem:[#allocation2 + $0x58]]
    %v656 = vstv %s654
    %v657 = vmul.f32 %v656, %v590
    %v658 = vmul.f32 %v656, %v591
    %v659 = vstv %s655
    %v660 = vmul.f32 %v659, %v592
    %v661 = vmul.f32 %v659, %v593
    %v662 = vadd.f32 %v657, %v660
    %v663 = vadd.f32 %v658, %v661
    %v664 = vadd.f32 %v538, %v662
    %v665 = vadd.f32 %v539, %v663
    %s666 = sld [smem:[#allocation2 + $0x2e]]
    %s667 = sld [smem:[#allocation2 + $0x5f]]
    %v668 = vstv %s666
    %v669 = vmul.f32 %v668, %v590
    %v670 = vmul.f32 %v668, %v591
    %v671 = vstv %s667
    %v672 = vmul.f32 %v671, %v592
    %v673 = vmul.f32 %v671, %v593
    %v674 = vadd.f32 %v669, %v672
    %v675 = vadd.f32 %v670, %v673
    %v676 = vadd.f32 %v559, %v674
    %v677 = vadd.f32 %v560, %v675
    %678 = vst [vmem:[#allocation1] ss:$9 sm:$0xff] %v64
    %s679 = scalar_lea.vmem [#allocation1], 1
    %680 = vst [vmem:[%s679] ss:$9 sm:$0xff] %v65
    %v681 = vld [vmem:[#allocation1] sm:$0xff]
    %v682 = vld [vmem:[#allocation1 + $0x9] sm:$0xff]
    %685 = vrot.lane.b32.xlu0 %v681, 126
    %v686 = vpop.permute.xlu0 %685
    %687 = vrot.lane.b32.xlu0 %v682, 126
    %v688 = vpop.permute.xlu0 %687
    %vm689 = vcmp.lt.s32.totalorder %v69, 126
    %v690 = vsel %vm689, %v686, %v688
    %v691 = vsel %vm689, %v688, %v686
    %692 = vst [vmem:[#allocation1] ss:$9 sm:$0xff] %v66
    %s693 = scalar_lea.vmem [#allocation1], 1
    %694 = vst [vmem:[%s693] ss:$9 sm:$0xff] %v67
    %v695 = vld [vmem:[#allocation1] sm:$0xff]
    %v696 = vld [vmem:[#allocation1 + $0x9] sm:$0xff]
    %699 = vrot.lane.b32.xlu0 %v695, 126
    %v700 = vpop.permute.xlu0 %699
    %701 = vrot.lane.b32.xlu0 %v696, 126
    %v702 = vpop.permute.xlu0 %701
    %v703 = vsel %vm689, %v700, %v702
    %v704 = vsel %vm689, %v702, %v700
    %vm705 = vcmp.lt.s32.totalorder %v71, 14
    %vm706 = vcmp.lt.s32.totalorder %v72, 14
    %v707 = vsel %vm705, %v690, 0.0
    %v708 = vsel %vm706, %v691, 0.0
    %v709 = vsel %vm705, %v703, 0.0
    %v710 = vsel %vm706, %v704, 0.0
    %s711 = sld [smem:[#allocation2 + $0x5]]
    %s712 = sld [smem:[#allocation2 + $0x36]]
    %v713 = vstv %s711
    %v714 = vmul.f32 %v713, %v707
    %v715 = vmul.f32 %v713, %v708
    %v716 = vstv %s712
    %v717 = vmul.f32 %v716, %v709
    %v718 = vmul.f32 %v716, %v710
    %v719 = vadd.f32 %v714, %v717
    %v720 = vadd.f32 %v715, %v718
    %v721 = vadd.f32 %v604, %v719
    %v722 = vadd.f32 %v605, %v720
    %s723 = sld [smem:[#allocation2 + $0xc]]
    %s724 = sld [smem:[#allocation2 + $0x3d]]
    %v725 = vstv %s723
    %v726 = vmul.f32 %v725, %v707
    %v727 = vmul.f32 %v725, %v708
    %v728 = vstv %s724
    %v729 = vmul.f32 %v728, %v709
    %v730 = vmul.f32 %v728, %v710
    %v731 = vadd.f32 %v726, %v729
    %v732 = vadd.f32 %v727, %v730
    %v733 = vadd.f32 %v616, %v731
    %v734 = vadd.f32 %v617, %v732
    %s735 = sld [smem:[#allocation2 + $0x13]]
    %s736 = sld [smem:[#allocation2 + $0x44]]
    %v737 = vstv %s735
    %v738 = vmul.f32 %v737, %v707
    %v739 = vmul.f32 %v737, %v708
    %v740 = vstv %s736
    %v741 = vmul.f32 %v740, %v709
    %v742 = vmul.f32 %v740, %v710
    %v743 = vadd.f32 %v738, %v741
    %v744 = vadd.f32 %v739, %v742
    %v745 = vadd.f32 %v628, %v743
    %v746 = vadd.f32 %v629, %v744
    %s747 = sld [smem:[#allocation2 + $0x1a]]
    %s748 = sld [smem:[#allocation2 + $0x4b]]
    %v749 = vstv %s747
    %v750 = vmul.f32 %v749, %v707
    %v751 = vmul.f32 %v749, %v708
    %v752 = vstv %s748
    %v753 = vmul.f32 %v752, %v709
    %v754 = vmul.f32 %v752, %v710
    %v755 = vadd.f32 %v750, %v753
    %v756 = vadd.f32 %v751, %v754
    %v757 = vadd.f32 %v640, %v755
    %v758 = vadd.f32 %v641, %v756
    %s759 = sld [smem:[#allocation2 + $0x21]]
    %s760 = sld [smem:[#allocation2 + $0x52]]
    %v761 = vstv %s759
    %v762 = vmul.f32 %v761, %v707
    %v763 = vmul.f32 %v761, %v708
    %v764 = vstv %s760
    %v765 = vmul.f32 %v764, %v709
    %v766 = vmul.f32 %v764, %v710
    %v767 = vadd.f32 %v762, %v765
    %v768 = vadd.f32 %v763, %v766
    %v769 = vadd.f32 %v652, %v767
    %v770 = vadd.f32 %v653, %v768
    %s771 = sld [smem:[#allocation2 + $0x28]]
    %s772 = sld [smem:[#allocation2 + $0x59]]
    %v773 = vstv %s771
    %v774 = vmul.f32 %v773, %v707
    %v775 = vmul.f32 %v773, %v708
    %v776 = vstv %s772
    %v777 = vmul.f32 %v776, %v709
    %v778 = vmul.f32 %v776, %v710
    %v779 = vadd.f32 %v774, %v777
    %v780 = vadd.f32 %v775, %v778
    %v781 = vadd.f32 %v664, %v779
    %v782 = vadd.f32 %v665, %v780
    %s783 = sld [smem:[#allocation2 + $0x2f]]
    %s784 = sld [smem:[#allocation2 + $0x60]]
    %v785 = vstv %s783
    %v786 = vmul.f32 %v785, %v707
    %v787 = vmul.f32 %v785, %v708
    %v788 = vstv %s784
    %v789 = vmul.f32 %v788, %v709
    %v790 = vmul.f32 %v788, %v710
    %v791 = vadd.f32 %v786, %v789
    %v792 = vadd.f32 %v787, %v790
    %v793 = vadd.f32 %v676, %v791
    %v794 = vadd.f32 %v677, %v792
    %795 = vst [vmem:[#allocation1] ss:$9 sm:$0xff] %v64
    %s796 = scalar_lea.vmem [#allocation1], 1
    %797 = vst [vmem:[%s796] ss:$9 sm:$0xff] %v65
    %v798 = vld [vmem:[#allocation1] sm:$0xff]
    %v799 = vld [vmem:[#allocation1 + $0x9] sm:$0xff]
    %802 = vrot.lane.b32.xlu0 %v798, 125
    %v803 = vpop.permute.xlu0 %802
    %804 = vrot.lane.b32.xlu0 %v799, 125
    %v805 = vpop.permute.xlu0 %804
    %vm806 = vcmp.lt.s32.totalorder %v69, 125
    %v807 = vsel %vm806, %v803, %v805
    %v808 = vsel %vm806, %v805, %v803
    %809 = vst [vmem:[#allocation1] ss:$9 sm:$0xff] %v66
    %s810 = scalar_lea.vmem [#allocation1], 1
    %811 = vst [vmem:[%s810] ss:$9 sm:$0xff] %v67
    %v812 = vld [vmem:[#allocation1] sm:$0xff]
    %v813 = vld [vmem:[#allocation1 + $0x9] sm:$0xff]
    %816 = vrot.lane.b32.xlu0 %v812, 125
    %v817 = vpop.permute.xlu0 %816
    %818 = vrot.lane.b32.xlu0 %v813, 125
    %v819 = vpop.permute.xlu0 %818
    %v820 = vsel %vm806, %v817, %v819
    %v821 = vsel %vm806, %v819, %v817
    %vm822 = vcmp.lt.s32.totalorder %v71, 13
    %vm823 = vcmp.lt.s32.totalorder %v72, 13
    %v824 = vsel %vm822, %v807, 0.0
    %v825 = vsel %vm823, %v808, 0.0
    %v826 = vsel %vm822, %v820, 0.0
    %v827 = vsel %vm823, %v821, 0.0
    %s828 = sld [smem:[#allocation2 + $0x6]]
    %s829 = sld [smem:[#allocation2 + $0x37]]
    %v830 = vstv %s828
    %v831 = vmul.f32 %v830, %v824
    %v832 = vmul.f32 %v830, %v825
    %v833 = vstv %s829
    %v834 = vmul.f32 %v833, %v826
    %v835 = vmul.f32 %v833, %v827
    %v836 = vadd.f32 %v831, %v834
    %v837 = vadd.f32 %v832, %v835
    %v838 = vadd.f32 %v721, %v836
    %v839 = vadd.f32 %v722, %v837
    %s840 = sld [smem:[#allocation2 + $0xd]]
    %s841 = sld [smem:[#allocation2 + $0x3e]]
    %v842 = vstv %s840
    %v843 = vmul.f32 %v842, %v824
    %v844 = vmul.f32 %v842, %v825
    %v845 = vstv %s841
    %v846 = vmul.f32 %v845, %v826
    %v847 = vmul.f32 %v845, %v827
    %v848 = vadd.f32 %v843, %v846
    %v849 = vadd.f32 %v844, %v847
    %v850 = vadd.f32 %v733, %v848
    %v851 = vadd.f32 %v734, %v849
    %s852 = sld [smem:[#allocation2 + $0x14]]
    %s853 = sld [smem:[#allocation2 + $0x45]]
    %v854 = vstv %s852
    %v855 = vmul.f32 %v854, %v824
    %v856 = vmul.f32 %v854, %v825
    %v857 = vstv %s853
    %v858 = vmul.f32 %v857, %v826
    %v859 = vmul.f32 %v857, %v827
    %v860 = vadd.f32 %v855, %v858
    %v861 = vadd.f32 %v856, %v859
    %v862 = vadd.f32 %v745, %v860
    %v863 = vadd.f32 %v746, %v861
    %s864 = sld [smem:[#allocation2 + $0x1b]]
    %s865 = sld [smem:[#allocation2 + $0x4c]]
    %v866 = vstv %s864
    %v867 = vmul.f32 %v866, %v824
    %v868 = vmul.f32 %v866, %v825
    %v869 = vstv %s865
    %v870 = vmul.f32 %v869, %v826
    %v871 = vmul.f32 %v869, %v827
    %v872 = vadd.f32 %v867, %v870
    %v873 = vadd.f32 %v868, %v871
    %v874 = vadd.f32 %v757, %v872
    %v875 = vadd.f32 %v758, %v873
    %s876 = sld [smem:[#allocation2 + $0x22]]
    %s877 = sld [smem:[#allocation2 + $0x53]]
    %v878 = vstv %s876
    %v879 = vmul.f32 %v878, %v824
    %v880 = vmul.f32 %v878, %v825
    %v881 = vstv %s877
    %v882 = vmul.f32 %v881, %v826
    %v883 = vmul.f32 %v881, %v827
    %v884 = vadd.f32 %v879, %v882
    %v885 = vadd.f32 %v880, %v883
    %v886 = vadd.f32 %v769, %v884
    %v887 = vadd.f32 %v770, %v885
    %s888 = sld [smem:[#allocation2 + $0x29]]
    %s889 = sld [smem:[#allocation2 + $0x5a]]
    %v890 = vstv %s888
    %v891 = vmul.f32 %v890, %v824
    %v892 = vmul.f32 %v890, %v825
    %v893 = vstv %s889
    %v894 = vmul.f32 %v893, %v826
    %v895 = vmul.f32 %v893, %v827
    %v896 = vadd.f32 %v891, %v894
    %v897 = vadd.f32 %v892, %v895
    %v898 = vadd.f32 %v781, %v896
    %v899 = vadd.f32 %v782, %v897
    %s900 = sld [smem:[#allocation2 + $0x30]]
    %s901 = sld [smem:[#allocation2 + $0x61]]
    %v902 = vstv %s900
    %v903 = vmul.f32 %v902, %v824
    %v904 = vmul.f32 %v902, %v825
    %v905 = vstv %s901
    %v906 = vmul.f32 %v905, %v826
    %v907 = vmul.f32 %v905, %v827
    %v908 = vadd.f32 %v903, %v906
    %v909 = vadd.f32 %v904, %v907
    %v910 = vadd.f32 %v793, %v908
    %v911 = vadd.f32 %v794, %v909
    %912 = vrot.lane.b32.xlu0 %v838, 48
    %v913 = vpop.permute.xlu0 %912
    %914 = vrot.lane.b32.xlu0 %v839, 48
    %v915 = vpop.permute.xlu0 %914
    %vm916 = vcmp.lt.s32.totalorder %v69, 48
    %v917 = vsel %vm916, %v913, %v915
    %v918 = vsel %vm916, %v915, %v913
    %vm919 = vcmp.ge.s32.totalorder %v69, 48
    %vm920 = vcmp.ge.s32.totalorder %v70, 48
    %v921 = vsel %vm919, %v918, 0.0
    %v922 = vsel %vm920, %v917, 0.0
    %923 = vrot.lane.b32.xlu0 %v850, 32
    %v924 = vpop.permute.xlu0 %923
    %925 = vrot.lane.b32.xlu0 %v851, 32
    %v926 = vpop.permute.xlu0 %925
    %vm927 = vcmp.lt.s32.totalorder %v69, 32
    %v928 = vsel %vm927, %v924, %v926
    %v929 = vsel %vm927, %v926, %v924
    %vm930 = vcmp.ge.s32.totalorder %v69, 32
    %vm931 = vcmp.ge.s32.totalorder %v70, 32
    %v932 = vsel %vm930, %v929, 0.0
    %v933 = vsel %vm931, %v928, 0.0
    %v934 = vadd.f32 %v921, %v932
    %v935 = vadd.f32 %v922, %v933
    %936 = vrot.lane.b32.xlu0 %v862, 16
    %v937 = vpop.permute.xlu0 %936
    %938 = vrot.lane.b32.xlu0 %v863, 16
    %v939 = vpop.permute.xlu0 %938
    %vm940 = vcmp.lt.s32.totalorder %v69, 16
    %v941 = vsel %vm940, %v937, %v939
    %v942 = vsel %vm940, %v939, %v937
    %vm943 = vcmp.ge.s32.totalorder %v69, 16
    %vm944 = vcmp.ge.s32.totalorder %v70, 16
    %v945 = vsel %vm943, %v942, 0.0
    %v946 = vsel %vm944, %v941, 0.0
    %v947 = vadd.f32 %v934, %v945
    %v948 = vadd.f32 %v935, %v946
    %v949 = vadd.f32 %v947, %v874
    %v950 = vadd.f32 %v948, %v875
    %951 = vrot.lane.b32.xlu0 %v886, 112
    %v952 = vpop.permute.xlu0 %951
    %953 = vrot.lane.b32.xlu0 %v887, 112
    %v954 = vpop.permute.xlu0 %953
    %vm955 = vcmp.lt.s32.totalorder %v69, 112
    %v956 = vsel %vm955, %v952, %v954
    %v957 = vsel %vm955, %v954, %v952
    %vm958 = vcmp.lt.s32.totalorder %v69, 240
    %vm959 = vcmp.lt.s32.totalorder %v70, 240
    %v960 = vsel %vm958, %v956, 0.0
    %v961 = vsel %vm959, %v957, 0.0
    %v962 = vadd.f32 %v949, %v960
    %v963 = vadd.f32 %v950, %v961
    %964 = vrot.lane.b32.xlu0 %v898, 96
    %v965 = vpop.permute.xlu0 %964
    %966 = vrot.lane.b32.xlu0 %v899, 96
    %v967 = vpop.permute.xlu0 %966
    %vm968 = vcmp.lt.s32.totalorder %v69, 96
    %v969 = vsel %vm968, %v965, %v967
    %v970 = vsel %vm968, %v967, %v965
    %vm971 = vcmp.lt.s32.totalorder %v69, 224
    %vm972 = vcmp.lt.s32.totalorder %v70, 224
    %v973 = vsel %vm971, %v969, 0.0
    %v974 = vsel %vm972, %v970, 0.0
    %v975 = vadd.f32 %v962, %v973
    %v976 = vadd.f32 %v963, %v974
    %977 = vrot.lane.b32.xlu0 %v910, 80
    %v978 = vpop.permute.xlu0 %977
    %979 = vrot.lane.b32.xlu0 %v911, 80
    %v980 = vpop.permute.xlu0 %979
    %vm981 = vcmp.lt.s32.totalorder %v69, 80
    %v982 = vsel %vm981, %v978, %v980
    %v983 = vsel %vm981, %v980, %v978
    %vm984 = vcmp.lt.s32.totalorder %v69, 208
    %vm985 = vcmp.lt.s32.totalorder %v70, 208
    %v986 = vsel %vm984, %v982, 0.0
    %v987 = vsel %vm985, %v983, 0.0
    %v988 = vadd.f32 %v975, %v986
    %v989 = vadd.f32 %v976, %v987
    %v990 = vxor.u32 %v988, 2147483648
    %v991 = vxor.u32 %v989, 2147483648
    %v992 = vmul.f32 %v990, 1.442695
    %v993 = vpow.pop %v992
    %v994 = vmul.f32 %v991, 1.442695
    %v995 = vpow.pop %v994
    %v996 = vadd.f32 %v993, 1.0
    %v997 = vadd.f32 %v995, 1.0
    %v998 = vrcp.pop %v996
    %v999 = vmul.f32 %v996, %v998
    %v1000 = vsub.f32 1.0, %v999
    %v1001 = vmul.f32 %v998, %v1000
    %v1002 = vadd.f32 %v998, %v1001
    %vm1003 = vweird.f32 %v996
    %vm1004 = vweird.f32 %v998
    %vm1005 = vmor %vm1003, %vm1004
    %v1006 = vsel %vm1005, %v998, %v1002
    %v1007 = vand.u32 2147483647, %v996
    %vm1008 = vcmp.eq.f32.partialorder %v1007, 8.507059e+37
    %v1009 = vand.u32 %v996, 2147483648
    %v1010 = vor.u32 1.1754944e-38, %v1009
    %v1011 = vsel %vm1008, %v1010, %v1006
    %v1012 = vmul.f32 1.0, %v1011
    %v1013 = vrcp.pop %v997
    %v1014 = vmul.f32 %v997, %v1013
    %v1015 = vsub.f32 1.0, %v1014
    %v1016 = vmul.f32 %v1013, %v1015
    %v1017 = vadd.f32 %v1013, %v1016
    %vm1018 = vweird.f32 %v997
    %vm1019 = vweird.f32 %v1013
    %vm1020 = vmor %vm1018, %vm1019
    %v1021 = vsel %vm1020, %v1013, %v1017
    %v1022 = vand.u32 2147483647, %v997
    %vm1023 = vcmp.eq.f32.partialorder %v1022, 8.507059e+37
    %v1024 = vand.u32 %v997, 2147483648
    %v1025 = vor.u32 1.1754944e-38, %v1024
    %v1026 = vsel %vm1023, %v1025, %v1021
    %v1027 = vmul.f32 1.0, %v1026
    %v1028 = vadd.f32 %v1012, 1.0
    %v1029 = vadd.f32 %v1027, 1.0
    %v1030 = vmul.f32 %v988, %v1028
    %v1031 = vmul.f32 %v989, %v1029
    %v1034 = vrot.slane %v1031, 6
    %vm1035 = vcmask 1041408
    %v1036 = vsel %vm1035, %v1030, %v1034
    %1038 = vst [vmem:[#allocation7] sm:$0xf] %v1036
    // Predicated region
    $region18: #{tpu_custom_call.1} parent=1 // pred_check
      _
    $region19: #{tpu_custom_call.1} parent=1 // pred_check_branch
      %1040 = sbr.rel (0) target = $region21
    $region20: #{tpu_custom_call.1} parent=1 // pred_region
      %1042 = vsyncadd [#allocation4], 0
      %s1044 = sshll.u32 [#allocation7], 4
      %s1045 = int_to_ptr.vmem [resolvable:$true] %s1044
      %s1046 = sshll.u32 %s2, 4
      %s1047 = int_to_ptr.hbm [resolvable:$true] %s1046
      %1049 = dma.vmem_to_hbm [thread:$0]  %s1045, 64, %s1047, [#allocation4]
    $region21: #{tpu_custom_call.1} parent=1 // pred_fallthru
      _
    // Predicated region
    $region22: #{tpu_custom_call.1} parent=1 // pred_check
      _
    $region23: #{tpu_custom_call.1} parent=1 // pred_check_branch
      %1051 = sbr.rel (0) target = $region25
    $region24: #{tpu_custom_call.1} parent=1 // pred_region
      %1053 = dma.done [#allocation4], 64
    $region25: #{tpu_custom_call.1} parent=1 // pred_fallthru
      _
    %1054 = vsyncpa [#allocation3], 1
    %1055 = vsyncpa [#allocation4], 1
    %1056 = vsyncpa [#allocation5], 1

</llo_original>
